<compile_context>
chip_gen: v7x
topology: tpu7x:2x2x1
jax: 0.10.0
libtpu: 0.0.40
codegen_flags: <defaults>
</compile_context>

<pallas_src>
import functools

import jax
import jax.numpy as jnp
from jax.experimental import pallas as pl
from jax.experimental.pallas import tpu as pltpu

LEAKY_SLOPE = 0.2
BN_EPS = 1e-5
LANE = 128
VMEM_LIMIT_BYTES = 48 * 1024 * 1024  # safe on v5e/v6e (128 MiB) and v7x (64 MiB)


def _round_up(x, m):
    return (x + m - 1) // m * m


# --------------------------- Pallas kernels ---------------------------------

def _mm_kernel(p_ref, w_ref, y_ref, acc_ref, *, act):
    """Tiled matmul (+ optional LeakyReLU).  grid = (M tiles, K tiles)."""
    k = pl.program_id(1)

    @pl.when(k == 0)
    def _():
        acc_ref[...] = jnp.zeros_like(acc_ref)

    acc_ref[...] += jnp.dot(p_ref[...], w_ref[...],
                            preferred_element_type=jnp.float32)

    @pl.when(k == pl.num_programs(1) - 1)
    def _():
        y = acc_ref[...]
        if act:
            y = jnp.where(y > 0, y, LEAKY_SLOPE * y)
        y_ref[...] = y.astype(y_ref.dtype)


def _mm_stats_kernel(p_ref, w_ref, y_ref, sum_ref, sq_ref, acc_ref):
    """BatchNorm pass 1: tiled matmul + per-channel sum / sum-of-squares.

    sum_ref / sq_ref blocks are grid-resident (same block index for every grid
    step) and accumulated across the M axis; they are initialized at i == 0.
    """
    i = pl.program_id(0)
    k = pl.program_id(1)
    last_k = pl.num_programs(1) - 1

    @pl.when(k == 0)
    def _():
        acc_ref[...] = jnp.zeros_like(acc_ref)

    acc_ref[...] += jnp.dot(p_ref[...], w_ref[...],
                            preferred_element_type=jnp.float32)

    @pl.when((i == 0) & (k == last_k))
    def _():
        sum_ref[...] = jnp.zeros_like(sum_ref)
        sq_ref[...] = jnp.zeros_like(sq_ref)

    @pl.when(k == last_k)
    def _():
        y = acc_ref[...]
        y_ref[...] = y
        sum_ref[...] += jnp.sum(y, axis=0, keepdims=True)
        sq_ref[...] += jnp.sum(y * y, axis=0, keepdims=True)


def _bn_act_kernel(y_ref, sum_ref, sq_ref, gamma_ref, beta_ref, o_ref, *,
                   inv_count, act):
    """BatchNorm pass 2: normalize with batch stats + affine + LeakyReLU."""
    y = y_ref[...]
    mean = sum_ref[...] * inv_count                  # true-row-count mean
    ex2 = sq_ref[...] * inv_count
    var = jnp.maximum(ex2 - mean * mean, 0.0)        # biased (training) var
    y = (y - mean) * jax.lax.rsqrt(var + BN_EPS)
    y = y * gamma_ref[...] + beta_ref[...]
    if act:
        y = jnp.where(y > 0, y, LEAKY_SLOPE * y)
    o_ref[...] = y.astype(o_ref.dtype)


# --------------------------- wrappers ----------------------------------------

def _tile_sizes(M, K):
    tm = 512 if M >= 512 else _round_up(M, 16)
    M_pad = _round_up(M, tm)
    if K <= 1024:
        K_pad = _round_up(K, LANE)
        tk = K_pad
    else:
        tk = 1024
        K_pad = _round_up(K, tk)
    return tm, M_pad, tk, K_pad


def conv_block(patches, w_mat, gamma, beta, *, use_bn, use_act, out_dtype):
    """One conv layer (+ optional training-mode BN + LeakyReLU)."""
    M, K = patches.shape
    cout = w_mat.shape[1]
    tm, M_pad, tk, K_pad = _tile_sizes(M, K)
    Cout_pad = _round_up(cout, LANE)

    # bf16 MXU operands, zero-padded to lane/tile multiples (padding is exact
    # zero, so it contributes nothing to the dot or to the BN statistics).
    p = jnp.pad(patches.astype(jnp.bfloat16), ((0, M_pad - M), (0, K_pad - K)))
    w = jnp.pad(w_mat.astype(jnp.bfloat16), ((0, K_pad - K), (0, Cout_pad - cout)))

    grid = (M_pad // tm, K_pad // tk)
    p_spec = pl.BlockSpec((tm, tk), lambda i, k: (i, k))
    w_spec = pl.BlockSpec((tk, Cout_pad), lambda i, k: (k, 0))
    y_spec = pl.BlockSpec((tm, Cout_pad), lambda i, k: (i, 0))
    acc = pltpu.VMEM((tm, Cout_pad), jnp.float32)

    if not use_bn:
        out = pl.pallas_call(
            functools.partial(_mm_kernel, act=use_act),
            out_shape=jax.ShapeDtypeStruct((M_pad, Cout_pad), out_dtype),
            grid=grid,
            in_specs=[p_spec, w_spec],
            out_specs=y_spec,
            scratch_shapes=[acc],
            compiler_params=pltpu.CompilerParams(
                dimension_semantics=("parallel", "arbitrary"),
                vmem_limit_bytes=VMEM_LIMIT_BYTES),
        )(p, w)
        return out[:M, :cout]

    # ---- BN pass 1: matmul + per-channel sum / sumsq (M axis accumulates) ----
    y, ch_sum, ch_sq = pl.pallas_call(
        _mm_stats_kernel,
        out_shape=(jax.ShapeDtypeStruct((M_pad, Cout_pad), jnp.float32),
                   jax.ShapeDtypeStruct((1, Cout_pad), jnp.float32),
                   jax.ShapeDtypeStruct((1, Cout_pad), jnp.float32)),
        grid=grid,
        in_specs=[p_spec, w_spec],
        out_specs=(y_spec,
                   pl.BlockSpec((1, Cout_pad), lambda i, k: (0, 0)),
                   pl.BlockSpec((1, Cout_pad), lambda i, k: (0, 0))),
        scratch_shapes=[acc],
        compiler_params=pltpu.CompilerParams(
            dimension_semantics=("arbitrary", "arbitrary"),
            vmem_limit_bytes=VMEM_LIMIT_BYTES),
    )(p, w)

    gamma_p = jnp.pad(gamma, ((0, 0), (0, Cout_pad - cout)), constant_values=1.0)
    beta_p = jnp.pad(beta, ((0, 0), (0, Cout_pad - cout)))

    # ---- BN pass 2: tiled normalize + affine + LeakyReLU (parallel over M) ----
    out = pl.pallas_call(
        functools.partial(_bn_act_kernel, inv_count=1.0 / M, act=use_act),
        out_shape=jax.ShapeDtypeStruct((M_pad, Cout_pad), out_dtype),
        grid=(M_pad // tm,),
        in_specs=[
            pl.BlockSpec((tm, Cout_pad), lambda i: (i, 0)),
            pl.BlockSpec((1, Cout_pad), lambda i: (0, 0)),
            pl.BlockSpec((1, Cout_pad), lambda i: (0, 0)),
            pl.BlockSpec((1, Cout_pad), lambda i: (0, 0)),
            pl.BlockSpec((1, Cout_pad), lambda i: (0, 0)),
        ],
        out_specs=pl.BlockSpec((tm, Cout_pad), lambda i: (i, 0)),
        compiler_params=pltpu.CompilerParams(
            dimension_semantics=("parallel",),
            vmem_limit_bytes=VMEM_LIMIT_BYTES),
    )(y, ch_sum, ch_sq, gamma_p, beta_p)
    return out[:M, :cout]


def im2col_nhwc(x, kh, kw, stride, pad):
    """x: (N, H, W, C) -> patches (N*Ho*Wo, kh*kw*C), row-major over (n, ho, wo)."""
    N, H, W, C = x.shape
    xp = jnp.pad(x, ((0, 0), (pad, pad), (pad, pad), (0, 0)))
    Ho = (H + 2 * pad - kh) // stride + 1
    Wo = (W + 2 * pad - kw) // stride + 1
    cols = []
    for i in range(kh):
        for j in range(kw):
            cols.append(xp[:, i:i + stride * Ho:stride,
                           j:j + stride * Wo:stride, :])
    p = jnp.concatenate(cols, axis=-1)          # (N, Ho, Wo, kh*kw*C)
    return p.reshape(N * Ho * Wo, kh * kw * C), Ho, Wo


def init_encoder_params(key, nz=32, img_size=32, ndf=64, nc=3):
    kernel = 2 * (img_size // 32)
    # (Cin, Cout, k, stride, pad, use_bn, use_act) mirroring the nn.Sequential
    layer_defs = [
        (nc,      ndf,     4,      2, 1, False, True),
        (ndf,     ndf * 2, 4,      2, 1, True,  True),
        (ndf * 2, ndf * 4, 4,      2, 1, True,  True),
        (ndf * 4, ndf * 8, 4,      2, 1, True,  True),
        (ndf * 8, nz,      kernel, 1, 0, False, False),
    ]
    params = []
    for (cin, cout, k, s, p, use_bn, use_act) in layer_defs:
        key, wk = jax.random.split(key)
        w = 0.02 * jax.random.normal(wk, (k, k, cin, cout), jnp.float32)
        gamma = jnp.ones((1, cout), jnp.float32)   # BN weight (unused if no BN)
        beta = jnp.zeros((1, cout), jnp.float32)   # BN bias
        params.append(dict(w=w, gamma=gamma, beta=beta, k=k, s=s, p=p,
                           use_bn=use_bn, use_act=use_act))
    return params


def encoder_forward(x_nchw, params, nz):
    # NCHW (PyTorch convention) -> NHWC, bf16 activations between layers.
    x = jnp.transpose(x_nchw, (0, 2, 3, 1)).astype(jnp.bfloat16)
    N = x.shape[0]
    n_layers = len(params)
    for li, layer in enumerate(params):
        k, s, p = layer["k"], layer["s"], layer["p"]
        patches, Ho, Wo = im2col_nhwc(x, k, k, s, p)
        cin, cout = layer["w"].shape[2], layer["w"].shape[3]
        w_mat = layer["w"].reshape(k * k * cin, cout)
        out_dtype = jnp.float32 if li == n_layers - 1 else jnp.bfloat16
        y = conv_block(patches, w_mat, layer["gamma"], layer["beta"],
                       use_bn=layer["use_bn"], use_act=layer["use_act"],
                       out_dtype=out_dtype)
        x = y.reshape(N, Ho, Wo, cout)
    # final conv output is (N, 1, 1, nz); .view(-1, nz) equivalent:
    return x.reshape(-1, nz)


def encoder_reference(x_nchw, params, nz):
    """Pure-JAX reference using the same bf16-operand / f32-accumulate math."""
    x = jnp.transpose(x_nchw, (0, 2, 3, 1)).astype(jnp.bfloat16)
    N = x.shape[0]
    n_layers = len(params)
    for li, layer in enumerate(params):
        k, s, p = layer["k"], layer["s"], layer["p"]
        patches, Ho, Wo = im2col_nhwc(x, k, k, s, p)
        cin, cout = layer["w"].shape[2], layer["w"].shape[3]
        w_mat = layer["w"].reshape(k * k * cin, cout).astype(jnp.bfloat16)
        y = jnp.dot(patches.astype(jnp.bfloat16), w_mat,
                    preferred_element_type=jnp.float32)
        if layer["use_bn"]:
            mean = jnp.mean(y, axis=0, keepdims=True)
            var = jnp.maximum(jnp.mean(y * y, axis=0, keepdims=True)
                              - mean * mean, 0.0)
            y = (y - mean) * jax.lax.rsqrt(var + BN_EPS)
            y = y * layer["gamma"] + layer["beta"]
        if layer["use_act"]:
            y = jnp.where(y > 0, y, LEAKY_SLOPE * y)
        y = y.astype(jnp.float32 if li == n_layers - 1 else jnp.bfloat16)
        x = y.reshape(N, Ho, Wo, cout)
    return x.reshape(-1, nz)


if __name__ == "__main__":
    # Small but architecture-consistent shapes: img_size must be 32 so the
    # final conv kernel = 2*(32//32) = 2 reduces 2x2 -> 1x1 exactly.
    batch, nc, img_size, ndf, nz = 2, 3, 32, 16, 32

    key = jax.random.PRNGKey(0)
    pkey, xkey = jax.random.split(key)
    params = init_encoder_params(pkey, nz=nz, img_size=img_size, ndf=ndf, nc=nc)
    x = jax.random.normal(xkey, (batch, nc, img_size, img_size), jnp.float32)

    out = jax.block_until_ready(encoder_forward(x, params, nz))
    ref = jax.block_until_ready(encoder_reference(x, params, nz))

    assert out.shape == (batch, nz), out.shape
    assert bool(jnp.isfinite(out).all())
    max_err = float(jnp.max(jnp.abs(out.astype(jnp.float32) - ref)))
    assert max_err < 5e-2, f"max abs err vs reference: {max_err}"
    print("KERNEL_OK")
</pallas_src>

<mosaic_0001>
module attributes {stable_mosaic.version = 11 : i64} {
  func.func @_mm_kernel(%arg0: i32, %arg1: i32, %arg2: memref<512x128xbf16, #tpu.memory_space<vmem>>, %arg3: memref<128x128xbf16, #tpu.memory_space<vmem>>, %arg4: memref<512x128xbf16, #tpu.memory_space<vmem>>, %arg5: memref<512x128xf32, #tpu.memory_space<vmem>>) attributes {dimension_semantics = [#tpu.dimension_semantics<parallel>, #tpu.dimension_semantics<arbitrary>], iteration_bounds = array<i64: 1, 1>, scalar_prefetch = 0 : i64, scratch_operands = 1 : i64, tpu.core_type = #tpu.core_type<tc>, window_params = [{transform_indices = @transform_0, window_bounds = array<i64: 512, 128>}, {transform_indices = @transform_1, window_bounds = array<i64: 128, 128>}, {transform_indices = @transform_2, window_bounds = array<i64: 512, 128>}]} {
    %c0_i32 = arith.constant 0 : i32
    %0 = arith.cmpi eq, %arg1, %c0_i32 : i32
    %1 = arith.extui %0 : i1 to i32
    %c0_i32_0 = arith.constant 0 : i32
    %2 = arith.cmpi ne, %1, %c0_i32_0 : i32
    scf.if %2 {
      %cst_10 = arith.constant 0.000000e+00 : f32
      %12 = vector.broadcast %cst_10 : f32 to vector<512x128xf32>
      %c0_11 = arith.constant 0 : index
      %c0_12 = arith.constant 0 : index
      %13 = vector.load %arg5[%c0_11, %c0_12] : memref<512x128xf32, #tpu.memory_space<vmem>>, vector<512x128xf32>
      tpu.vector_store %arg5[%c0_11, %c0_12], %12 {strides = array<i32>} : memref<512x128xf32, #tpu.memory_space<vmem>>, vector<512x128xf32>,
    } else {
    }
    %c0 = arith.constant 0 : index
    %c0_1 = arith.constant 0 : index
    %3 = vector.load %arg5[%c0, %c0_1] : memref<512x128xf32, #tpu.memory_space<vmem>>, vector<512x128xf32>
    %c0_2 = arith.constant 0 : index
    %c0_3 = arith.constant 0 : index
    %4 = vector.load %arg2[%c0_2, %c0_3] : memref<512x128xbf16, #tpu.memory_space<vmem>>, vector<512x128xbf16>
    %c0_4 = arith.constant 0 : index
    %c0_5 = arith.constant 0 : index
    %5 = vector.load %arg3[%c0_4, %c0_5] : memref<128x128xbf16, #tpu.memory_space<vmem>>, vector<128x128xbf16>
    %cst = arith.constant dense<0.000000e+00> : vector<512x128xf32>
    %6 = tpu.matmul %4, %5, %cst {dimension_numbers = #tpu.dot_dimension_numbers<[1], [0], [0], [1], [0, 0, 1, 1], [], []>} : vector<512x128xbf16>, vector<128x128xbf16>, vector<512x128xf32> -> vector<512x128xf32>
    %7 = arith.addf %3, %6 : vector<512x128xf32>
    %c0_6 = arith.constant 0 : index
    %c0_7 = arith.constant 0 : index
    %8 = vector.load %arg5[%c0_6, %c0_7] : memref<512x128xf32, #tpu.memory_space<vmem>>, vector<512x128xf32>
    tpu.vector_store %arg5[%c0_6, %c0_7], %7 {strides = array<i32>} : memref<512x128xf32, #tpu.memory_space<vmem>>, vector<512x128xf32>,
    %c0_i32_8 = arith.constant 0 : i32
    %9 = arith.cmpi eq, %arg1, %c0_i32_8 : i32
    %10 = arith.extui %9 : i1 to i32
    %c0_i32_9 = arith.constant 0 : i32
    %11 = arith.cmpi ne, %10, %c0_i32_9 : i32
    scf.if %11 {
      %c0_10 = arith.constant 0 : index
      %c0_11 = arith.constant 0 : index
      %12 = vector.load %arg5[%c0_10, %c0_11] : memref<512x128xf32, #tpu.memory_space<vmem>>, vector<512x128xf32>
      %cst_12 = arith.constant 0.000000e+00 : f32
      %13 = vector.broadcast %cst_12 : f32 to vector<512x128xf32>
      %14 = arith.cmpf ogt, %12, %13 : vector<512x128xf32>
      %cst_13 = arith.constant 2.000000e-01 : f32
      %15 = vector.broadcast %cst_13 : f32 to vector<512x128xf32>
      %16 = arith.mulf %15, %12 : vector<512x128xf32>
      %17 = arith.select %14, %12, %16 : vector<512x128xi1>, vector<512x128xf32>
      %18 = arith.truncf %17 : vector<512x128xf32> to vector<512x128xbf16>
      %c0_14 = arith.constant 0 : index
      %c0_15 = arith.constant 0 : index
      %19 = vector.load %arg4[%c0_14, %c0_15] : memref<512x128xbf16, #tpu.memory_space<vmem>>, vector<512x128xbf16>
      tpu.vector_store %arg4[%c0_14, %c0_15], %18 {strides = array<i32>} : memref<512x128xbf16, #tpu.memory_space<vmem>>, vector<512x128xbf16>,
    } else {
    }
    return
  }
  func.func @transform_0(%arg0: i32, %arg1: i32) -> (i32, i32) {
    %c0_i32 = arith.constant 0 : i32
    return %arg0, %arg1 : i32, i32
  }
  func.func @transform_1(%arg0: i32, %arg1: i32) -> (i32, i32) {
    %c0_i32 = arith.constant 0 : i32
    %c0_i32_0 = arith.constant 0 : i32
    return %arg1, %c0_i32 : i32, i32
  }
  func.func @transform_2(%arg0: i32, %arg1: i32) -> (i32, i32) {
    %c0_i32 = arith.constant 0 : i32
    %c0_i32_0 = arith.constant 0 : i32
    return %arg0, %c0_i32 : i32, i32
  }
}

</mosaic_0001>

<llo_original>
// kernel: tpu_custom_call.1
$region0: #{tpu_custom_call.1}
  #allocation0 [shape = 'u32[]', space=smem, size = 0x4, offset = 0x4, fixed_abs, tag = 'smem constant byte address 0x4 - core index']
  #allocation1 [shape = 'u32[144,128]{1,0:T(1,128)}', space=vmem, size = 0x12000, scoped, tag = 'internal scratch']
  #allocation2 [shape = 'f32[512,128]{1,0:T(8,128)}', space=vmem, size = 0x40000, scoped, tag = 'scratch operand']
  %s0 = inlined_call_operand.hbm [shape: bf16[512,128], index: 0, kind: input, shape index: {}]
  %s1 = inlined_call_operand.hbm [shape: bf16[128,128], index: 1, kind: input, shape index: {}]
  %s2 = inlined_call_operand.hbm [shape: bf16[512,128], index: 2, kind: output, shape index: {}]
  %s3 = sld [smem:[#allocation0]]
  $region34: #{tpu_custom_call.1} parent=0
    _
  %s5 = ssub.s32 1, %s3
  %s6 = scalar_select 0, %s5, %s3
  $region1: #{tpu_custom_call.1} parent=0
    #allocation3 [shape = 'u8[131072]{0}', space=vmem, size = 0x20000, scoped, tag = 'input window, operand 0, single buffered']
    #allocation4 [shape = 's32[1]{0}', space=sflag, size = 0x4, scoped, tag = 'scoped memory for tpu_custom_call.1']
    #allocation5 [shape = 's32[1]{0}', space=sflag, size = 0x4, scoped, tag = 'scoped memory for tpu_custom_call.1']
    #allocation6 [shape = 'u8[32768]{0}', space=vmem, size = 0x8000, scoped, tag = 'input window, operand 1, single buffered']
    #allocation7 [shape = 's32[1]{0}', space=sflag, size = 0x4, scoped, tag = 'scoped memory for tpu_custom_call.1']
    #allocation8 [shape = 'u8[131072]{0}', space=vmem, size = 0x20000, scoped, tag = 'output window, operand 0, single buffered']
    %7 = vsyncpa [#allocation4], 0
    %8 = vsyncpa [#allocation7], 0
    %9 = vsyncpa [#allocation5], 0
    // Predicated region
    $region2: #{tpu_custom_call.1} parent=1 // pred_check
      _
    $region3: #{tpu_custom_call.1} parent=1 // pred_check_branch
      %11 = sbr.rel (0) target = $region5
    $region4: #{tpu_custom_call.1} parent=1 // pred_region
      %s13 = ssub.s32 4096, 4096
      %14 = vsyncadd [#allocation4], %s13
      %s15 = sshll.u32 [#allocation3], 4
      %s16 = int_to_ptr.vmem [resolvable:$true] %s15
      %21 = dma.hbm_to_vmem [thread:$0]  %s0, 4096, %s16, [#allocation4], 64, 64, 4
    $region5: #{tpu_custom_call.1} parent=1 // pred_fallthru
      _
    // Predicated region
    $region6: #{tpu_custom_call.1} parent=1 // pred_check
      _
    $region7: #{tpu_custom_call.1} parent=1 // pred_check_branch
      %23 = sbr.rel (0) target = $region9
    $region8: #{tpu_custom_call.1} parent=1 // pred_region
      %s25 = ssub.s32 1024, 1024
      %26 = vsyncadd [#allocation7], %s25
      %s27 = sshll.u32 [#allocation6], 4
      %s28 = int_to_ptr.vmem [resolvable:$true] %s27
      %33 = dma.hbm_to_vmem [thread:$0]  %s1, 1024, %s28, [#allocation7], 64, 64, 4
    $region9: #{tpu_custom_call.1} parent=1 // pred_fallthru
      _
    // Predicated region
    $region10: #{tpu_custom_call.1} parent=1 // pred_check
      _
    $region11: #{tpu_custom_call.1} parent=1 // pred_check_branch
      %35 = sbr.rel (0) target = $region13
    $region12: #{tpu_custom_call.1} parent=1 // pred_region
      %36 = dma.done [#allocation4], 4096
    $region13: #{tpu_custom_call.1} parent=1 // pred_fallthru
      _
    // Predicated region
    $region14: #{tpu_custom_call.1} parent=1 // pred_check
      _
    $region15: #{tpu_custom_call.1} parent=1 // pred_check_branch
      %38 = sbr.rel (0) target = $region17
    $region16: #{tpu_custom_call.1} parent=1 // pred_region
      %39 = dma.done [#allocation7], 1024
    $region17: #{tpu_custom_call.1} parent=1 // pred_fallthru
      _
    %p41 = scmp.eq.s32.totalorder 0, 0
    // Predicated region
    $region18: #{tpu_custom_call.1} parent=1 // pred_check
      %p42 = pneg %p41
    $region19: #{tpu_custom_call.1} parent=1 // pred_check_branch
      %44 = sbr.rel (%p42) target = $region21
    $region20: #{tpu_custom_call.1} parent=1 // pred_region
      %45 = vst [vmem:[#allocation2] sm:$0xff] 0.0
      %46 = vst [vmem:[#allocation2 + $0x8] sm:$0xff] 0.0
      %47 = vst [vmem:[#allocation2 + $0x10] sm:$0xff] 0.0
      %48 = vst [vmem:[#allocation2 + $0x18] sm:$0xff] 0.0
      %49 = vst [vmem:[#allocation2 + $0x20] sm:$0xff] 0.0
      %50 = vst [vmem:[#allocation2 + $0x28] sm:$0xff] 0.0
      %51 = vst [vmem:[#allocation2 + $0x30] sm:$0xff] 0.0
      %52 = vst [vmem:[#allocation2 + $0x38] sm:$0xff] 0.0
      %53 = vst [vmem:[#allocation2 + $0x40] sm:$0xff] 0.0
      %54 = vst [vmem:[#allocation2 + $0x48] sm:$0xff] 0.0
      %55 = vst [vmem:[#allocation2 + $0x50] sm:$0xff] 0.0
      %56 = vst [vmem:[#allocation2 + $0x58] sm:$0xff] 0.0
      %57 = vst [vmem:[#allocation2 + $0x60] sm:$0xff] 0.0
      %58 = vst [vmem:[#allocation2 + $0x68] sm:$0xff] 0.0
      %59 = vst [vmem:[#allocation2 + $0x70] sm:$0xff] 0.0
      %60 = vst [vmem:[#allocation2 + $0x78] sm:$0xff] 0.0
      %61 = vst [vmem:[#allocation2 + $0x80] sm:$0xff] 0.0
      %62 = vst [vmem:[#allocation2 + $0x88] sm:$0xff] 0.0
      %63 = vst [vmem:[#allocation2 + $0x90] sm:$0xff] 0.0
      %64 = vst [vmem:[#allocation2 + $0x98] sm:$0xff] 0.0
      %65 = vst [vmem:[#allocation2 + $0xa0] sm:$0xff] 0.0
      %66 = vst [vmem:[#allocation2 + $0xa8] sm:$0xff] 0.0
      %67 = vst [vmem:[#allocation2 + $0xb0] sm:$0xff] 0.0
      %68 = vst [vmem:[#allocation2 + $0xb8] sm:$0xff] 0.0
      %69 = vst [vmem:[#allocation2 + $0xc0] sm:$0xff] 0.0
      %70 = vst [vmem:[#allocation2 + $0xc8] sm:$0xff] 0.0
      %71 = vst [vmem:[#allocation2 + $0xd0] sm:$0xff] 0.0
      %72 = vst [vmem:[#allocation2 + $0xd8] sm:$0xff] 0.0
      %73 = vst [vmem:[#allocation2 + $0xe0] sm:$0xff] 0.0
      %74 = vst [vmem:[#allocation2 + $0xe8] sm:$0xff] 0.0
      %75 = vst [vmem:[#allocation2 + $0xf0] sm:$0xff] 0.0
      %76 = vst [vmem:[#allocation2 + $0xf8] sm:$0xff] 0.0
      %77 = vst [vmem:[#allocation2 + $0x100] sm:$0xff] 0.0
      %78 = vst [vmem:[#allocation2 + $0x108] sm:$0xff] 0.0
      %79 = vst [vmem:[#allocation2 + $0x110] sm:$0xff] 0.0
      %80 = vst [vmem:[#allocation2 + $0x118] sm:$0xff] 0.0
      %81 = vst [vmem:[#allocation2 + $0x120] sm:$0xff] 0.0
      %82 = vst [vmem:[#allocation2 + $0x128] sm:$0xff] 0.0
      %83 = vst [vmem:[#allocation2 + $0x130] sm:$0xff] 0.0
      %84 = vst [vmem:[#allocation2 + $0x138] sm:$0xff] 0.0
      %85 = vst [vmem:[#allocation2 + $0x140] sm:$0xff] 0.0
      %86 = vst [vmem:[#allocation2 + $0x148] sm:$0xff] 0.0
      %87 = vst [vmem:[#allocation2 + $0x150] sm:$0xff] 0.0
      %88 = vst [vmem:[#allocation2 + $0x158] sm:$0xff] 0.0
      %89 = vst [vmem:[#allocation2 + $0x160] sm:$0xff] 0.0
      %90 = vst [vmem:[#allocation2 + $0x168] sm:$0xff] 0.0
      %91 = vst [vmem:[#allocation2 + $0x170] sm:$0xff] 0.0
      %92 = vst [vmem:[#allocation2 + $0x178] sm:$0xff] 0.0
      %93 = vst [vmem:[#allocation2 + $0x180] sm:$0xff] 0.0
      %94 = vst [vmem:[#allocation2 + $0x188] sm:$0xff] 0.0
      %95 = vst [vmem:[#allocation2 + $0x190] sm:$0xff] 0.0
      %96 = vst [vmem:[#allocation2 + $0x198] sm:$0xff] 0.0
      %97 = vst [vmem:[#allocation2 + $0x1a0] sm:$0xff] 0.0
      %98 = vst [vmem:[#allocation2 + $0x1a8] sm:$0xff] 0.0
      %99 = vst [vmem:[#allocation2 + $0x1b0] sm:$0xff] 0.0
      %100 = vst [vmem:[#allocation2 + $0x1b8] sm:$0xff] 0.0
      %101 = vst [vmem:[#allocation2 + $0x1c0] sm:$0xff] 0.0
      %102 = vst [vmem:[#allocation2 + $0x1c8] sm:$0xff] 0.0
      %103 = vst [vmem:[#allocation2 + $0x1d0] sm:$0xff] 0.0
      %104 = vst [vmem:[#allocation2 + $0x1d8] sm:$0xff] 0.0
      %105 = vst [vmem:[#allocation2 + $0x1e0] sm:$0xff] 0.0
      %106 = vst [vmem:[#allocation2 + $0x1e8] sm:$0xff] 0.0
      %107 = vst [vmem:[#allocation2 + $0x1f0] sm:$0xff] 0.0
      %108 = vst [vmem:[#allocation2 + $0x1f8] sm:$0xff] 0.0
    $region21: #{tpu_custom_call.1} parent=1 // pred_fallthru
      _
    %v109 = vld [vmem:[#allocation2] sm:$0xff]
    %v110 = vld [vmem:[#allocation2 + $0x8] sm:$0xff]
    %v111 = vld [vmem:[#allocation2 + $0x10] sm:$0xff]
    %v112 = vld [vmem:[#allocation2 + $0x18] sm:$0xff]
    %v113 = vld [vmem:[#allocation2 + $0x20] sm:$0xff]
    %v114 = vld [vmem:[#allocation2 + $0x28] sm:$0xff]
    %v115 = vld [vmem:[#allocation2 + $0x30] sm:$0xff]
    %v116 = vld [vmem:[#allocation2 + $0x38] sm:$0xff]
    %v117 = vld [vmem:[#allocation2 + $0x40] sm:$0xff]
    %v118 = vld [vmem:[#allocation2 + $0x48] sm:$0xff]
    %v119 = vld [vmem:[#allocation2 + $0x50] sm:$0xff]
    %v120 = vld [vmem:[#allocation2 + $0x58] sm:$0xff]
    %v121 = vld [vmem:[#allocation2 + $0x60] sm:$0xff]
    %v122 = vld [vmem:[#allocation2 + $0x68] sm:$0xff]
    %v123 = vld [vmem:[#allocation2 + $0x70] sm:$0xff]
    %v124 = vld [vmem:[#allocation2 + $0x78] sm:$0xff]
    %v125 = vld [vmem:[#allocation2 + $0x80] sm:$0xff]
    %v126 = vld [vmem:[#allocation2 + $0x88] sm:$0xff]
    %v127 = vld [vmem:[#allocation2 + $0x90] sm:$0xff]
    %v128 = vld [vmem:[#allocation2 + $0x98] sm:$0xff]
    %v129 = vld [vmem:[#allocation2 + $0xa0] sm:$0xff]
    %v130 = vld [vmem:[#allocation2 + $0xa8] sm:$0xff]
    %v131 = vld [vmem:[#allocation2 + $0xb0] sm:$0xff]
    %v132 = vld [vmem:[#allocation2 + $0xb8] sm:$0xff]
    %v133 = vld [vmem:[#allocation2 + $0xc0] sm:$0xff]
    %v134 = vld [vmem:[#allocation2 + $0xc8] sm:$0xff]
    %v135 = vld [vmem:[#allocation2 + $0xd0] sm:$0xff]
    %v136 = vld [vmem:[#allocation2 + $0xd8] sm:$0xff]
    %v137 = vld [vmem:[#allocation2 + $0xe0] sm:$0xff]
    %v138 = vld [vmem:[#allocation2 + $0xe8] sm:$0xff]
    %v139 = vld [vmem:[#allocation2 + $0xf0] sm:$0xff]
    %v140 = vld [vmem:[#allocation2 + $0xf8] sm:$0xff]
    %v141 = vld [vmem:[#allocation2 + $0x100] sm:$0xff]
    %v142 = vld [vmem:[#allocation2 + $0x108] sm:$0xff]
    %v143 = vld [vmem:[#allocation2 + $0x110] sm:$0xff]
    %v144 = vld [vmem:[#allocation2 + $0x118] sm:$0xff]
    %v145 = vld [vmem:[#allocation2 + $0x120] sm:$0xff]
    %v146 = vld [vmem:[#allocation2 + $0x128] sm:$0xff]
    %v147 = vld [vmem:[#allocation2 + $0x130] sm:$0xff]
    %v148 = vld [vmem:[#allocation2 + $0x138] sm:$0xff]
    %v149 = vld [vmem:[#allocation2 + $0x140] sm:$0xff]
    %v150 = vld [vmem:[#allocation2 + $0x148] sm:$0xff]
    %v151 = vld [vmem:[#allocation2 + $0x150] sm:$0xff]
    %v152 = vld [vmem:[#allocation2 + $0x158] sm:$0xff]
    %v153 = vld [vmem:[#allocation2 + $0x160] sm:$0xff]
    %v154 = vld [vmem:[#allocation2 + $0x168] sm:$0xff]
    %v155 = vld [vmem:[#allocation2 + $0x170] sm:$0xff]
    %v156 = vld [vmem:[#allocation2 + $0x178] sm:$0xff]
    %v157 = vld [vmem:[#allocation2 + $0x180] sm:$0xff]
    %v158 = vld [vmem:[#allocation2 + $0x188] sm:$0xff]
    %v159 = vld [vmem:[#allocation2 + $0x190] sm:$0xff]
    %v160 = vld [vmem:[#allocation2 + $0x198] sm:$0xff]
    %v161 = vld [vmem:[#allocation2 + $0x1a0] sm:$0xff]
    %v162 = vld [vmem:[#allocation2 + $0x1a8] sm:$0xff]
    %v163 = vld [vmem:[#allocation2 + $0x1b0] sm:$0xff]
    %v164 = vld [vmem:[#allocation2 + $0x1b8] sm:$0xff]
    %v165 = vld [vmem:[#allocation2 + $0x1c0] sm:$0xff]
    %v166 = vld [vmem:[#allocation2 + $0x1c8] sm:$0xff]
    %v167 = vld [vmem:[#allocation2 + $0x1d0] sm:$0xff]
    %v168 = vld [vmem:[#allocation2 + $0x1d8] sm:$0xff]
    %v169 = vld [vmem:[#allocation2 + $0x1e0] sm:$0xff]
    %v170 = vld [vmem:[#allocation2 + $0x1e8] sm:$0xff]
    %v171 = vld [vmem:[#allocation2 + $0x1f0] sm:$0xff]
    %v172 = vld [vmem:[#allocation2 + $0x1f8] sm:$0xff]
    %v173 = vld [vmem:[#allocation3] sm:$0xf]
    %v174 = vld [vmem:[#allocation3 + $0x4] sm:$0xf]
    %v175 = vld [vmem:[#allocation3 + $0x8] sm:$0xf]
    %v176 = vld [vmem:[#allocation3 + $0xc] sm:$0xf]
    %v177 = vld [vmem:[#allocation3 + $0x10] sm:$0xf]
    %v178 = vld [vmem:[#allocation3 + $0x14] sm:$0xf]
    %v179 = vld [vmem:[#allocation3 + $0x18] sm:$0xf]
    %v180 = vld [vmem:[#allocation3 + $0x1c] sm:$0xf]
    %v181 = vld [vmem:[#allocation3 + $0x20] sm:$0xf]
    %v182 = vld [vmem:[#allocation3 + $0x24] sm:$0xf]
    %v183 = vld [vmem:[#allocation3 + $0x28] sm:$0xf]
    %v184 = vld [vmem:[#allocation3 + $0x2c] sm:$0xf]
    %v185 = vld [vmem:[#allocation3 + $0x30] sm:$0xf]
    %v186 = vld [vmem:[#allocation3 + $0x34] sm:$0xf]
    %v187 = vld [vmem:[#allocation3 + $0x38] sm:$0xf]
    %v188 = vld [vmem:[#allocation3 + $0x3c] sm:$0xf]
    %v189 = vld [vmem:[#allocation3 + $0x40] sm:$0xf]
    %v190 = vld [vmem:[#allocation3 + $0x44] sm:$0xf]
    %v191 = vld [vmem:[#allocation3 + $0x48] sm:$0xf]
    %v192 = vld [vmem:[#allocation3 + $0x4c] sm:$0xf]
    %v193 = vld [vmem:[#allocation3 + $0x50] sm:$0xf]
    %v194 = vld [vmem:[#allocation3 + $0x54] sm:$0xf]
    %v195 = vld [vmem:[#allocation3 + $0x58] sm:$0xf]
    %v196 = vld [vmem:[#allocation3 + $0x5c] sm:$0xf]
    %v197 = vld [vmem:[#allocation3 + $0x60] sm:$0xf]
    %v198 = vld [vmem:[#allocation3 + $0x64] sm:$0xf]
    %v199 = vld [vmem:[#allocation3 + $0x68] sm:$0xf]
    %v200 = vld [vmem:[#allocation3 + $0x6c] sm:$0xf]
    %v201 = vld [vmem:[#allocation3 + $0x70] sm:$0xf]
    %v202 = vld [vmem:[#allocation3 + $0x74] sm:$0xf]
    %v203 = vld [vmem:[#allocation3 + $0x78] sm:$0xf]
    %v204 = vld [vmem:[#allocation3 + $0x7c] sm:$0xf]
    %v205 = vld [vmem:[#allocation3 + $0x80] sm:$0xf]
    %v206 = vld [vmem:[#allocation3 + $0x84] sm:$0xf]
    %v207 = vld [vmem:[#allocation3 + $0x88] sm:$0xf]
    %v208 = vld [vmem:[#allocation3 + $0x8c] sm:$0xf]
    %v209 = vld [vmem:[#allocation3 + $0x90] sm:$0xf]
    %v210 = vld [vmem:[#allocation3 + $0x94] sm:$0xf]
    %v211 = vld [vmem:[#allocation3 + $0x98] sm:$0xf]
    %v212 = vld [vmem:[#allocation3 + $0x9c] sm:$0xf]
    %v213 = vld [vmem:[#allocation3 + $0xa0] sm:$0xf]
    %v214 = vld [vmem:[#allocation3 + $0xa4] sm:$0xf]
    %v215 = vld [vmem:[#allocation3 + $0xa8] sm:$0xf]
    %v216 = vld [vmem:[#allocation3 + $0xac] sm:$0xf]
    %v217 = vld [vmem:[#allocation3 + $0xb0] sm:$0xf]
    %v218 = vld [vmem:[#allocation3 + $0xb4] sm:$0xf]
    %v219 = vld [vmem:[#allocation3 + $0xb8] sm:$0xf]
    %v220 = vld [vmem:[#allocation3 + $0xbc] sm:$0xf]
    %v221 = vld [vmem:[#allocation3 + $0xc0] sm:$0xf]
    %v222 = vld [vmem:[#allocation3 + $0xc4] sm:$0xf]
    %v223 = vld [vmem:[#allocation3 + $0xc8] sm:$0xf]
    %v224 = vld [vmem:[#allocation3 + $0xcc] sm:$0xf]
    %v225 = vld [vmem:[#allocation3 + $0xd0] sm:$0xf]
    %v226 = vld [vmem:[#allocation3 + $0xd4] sm:$0xf]
    %v227 = vld [vmem:[#allocation3 + $0xd8] sm:$0xf]
    %v228 = vld [vmem:[#allocation3 + $0xdc] sm:$0xf]
    %v229 = vld [vmem:[#allocation3 + $0xe0] sm:$0xf]
    %v230 = vld [vmem:[#allocation3 + $0xe4] sm:$0xf]
    %v231 = vld [vmem:[#allocation3 + $0xe8] sm:$0xf]
    %v232 = vld [vmem:[#allocation3 + $0xec] sm:$0xf]
    %v233 = vld [vmem:[#allocation3 + $0xf0] sm:$0xf]
    %v234 = vld [vmem:[#allocation3 + $0xf4] sm:$0xf]
    %v235 = vld [vmem:[#allocation3 + $0xf8] sm:$0xf]
    %v236 = vld [vmem:[#allocation3 + $0xfc] sm:$0xf]
    %v237 = vld [vmem:[#allocation6] sm:$0xf]
    %v238 = vld [vmem:[#allocation6 + $0x4] sm:$0xf]
    %v239 = vld [vmem:[#allocation6 + $0x8] sm:$0xf]
    %v240 = vld [vmem:[#allocation6 + $0xc] sm:$0xf]
    %v241 = vld [vmem:[#allocation6 + $0x10] sm:$0xf]
    %v242 = vld [vmem:[#allocation6 + $0x14] sm:$0xf]
    %v243 = vld [vmem:[#allocation6 + $0x18] sm:$0xf]
    %v244 = vld [vmem:[#allocation6 + $0x1c] sm:$0xf]
    %v245 = vld [vmem:[#allocation6 + $0x20] sm:$0xf]
    %v246 = vld [vmem:[#allocation6 + $0x24] sm:$0xf]
    %v247 = vld [vmem:[#allocation6 + $0x28] sm:$0xf]
    %v248 = vld [vmem:[#allocation6 + $0x2c] sm:$0xf]
    %v249 = vld [vmem:[#allocation6 + $0x30] sm:$0xf]
    %v250 = vld [vmem:[#allocation6 + $0x34] sm:$0xf]
    %v251 = vld [vmem:[#allocation6 + $0x38] sm:$0xf]
    %v252 = vld [vmem:[#allocation6 + $0x3c] sm:$0xf]
    %v317 = vunpack.c.l.b16 %v173
    %v318 = vunpack.c.l.b16 %v174
    %v319 = vunpack.c.l.b16 %v175
    %v320 = vunpack.c.l.b16 %v176
    %v321 = vunpack.c.l.b16 %v177
    %v322 = vunpack.c.l.b16 %v178
    %v323 = vunpack.c.l.b16 %v179
    %v324 = vunpack.c.l.b16 %v180
    %v325 = vunpack.c.l.b16 %v181
    %v326 = vunpack.c.l.b16 %v182
    %v327 = vunpack.c.l.b16 %v183
    %v328 = vunpack.c.l.b16 %v184
    %v329 = vunpack.c.l.b16 %v185
    %v330 = vunpack.c.l.b16 %v186
    %v331 = vunpack.c.l.b16 %v187
    %v332 = vunpack.c.l.b16 %v188
    %v333 = vunpack.c.l.b16 %v189
    %v334 = vunpack.c.l.b16 %v190
    %v335 = vunpack.c.l.b16 %v191
    %v336 = vunpack.c.l.b16 %v192
    %v337 = vunpack.c.l.b16 %v193
    %v338 = vunpack.c.l.b16 %v194
    %v339 = vunpack.c.l.b16 %v195
    %v340 = vunpack.c.l.b16 %v196
    %v341 = vunpack.c.l.b16 %v197
    %v342 = vunpack.c.l.b16 %v198
    %v343 = vunpack.c.l.b16 %v199
    %v344 = vunpack.c.l.b16 %v200
    %v345 = vunpack.c.l.b16 %v201
    %v346 = vunpack.c.l.b16 %v202
    %v347 = vunpack.c.l.b16 %v203
    %v348 = vunpack.c.l.b16 %v204
    %v349 = vunpack.c.l.b16 %v205
    %v350 = vunpack.c.l.b16 %v206
    %v351 = vunpack.c.l.b16 %v207
    %v352 = vunpack.c.l.b16 %v208
    %v353 = vunpack.c.l.b16 %v209
    %v354 = vunpack.c.l.b16 %v210
    %v355 = vunpack.c.l.b16 %v211
    %v356 = vunpack.c.l.b16 %v212
    %v357 = vunpack.c.l.b16 %v213
    %v358 = vunpack.c.l.b16 %v214
    %v359 = vunpack.c.l.b16 %v215
    %v360 = vunpack.c.l.b16 %v216
    %v361 = vunpack.c.l.b16 %v217
    %v362 = vunpack.c.l.b16 %v218
    %v363 = vunpack.c.l.b16 %v219
    %v364 = vunpack.c.l.b16 %v220
    %v365 = vunpack.c.l.b16 %v221
    %v366 = vunpack.c.l.b16 %v222
    %v367 = vunpack.c.l.b16 %v223
    %v368 = vunpack.c.l.b16 %v224
    %v369 = vunpack.c.l.b16 %v225
    %v370 = vunpack.c.l.b16 %v226
    %v371 = vunpack.c.l.b16 %v227
    %v372 = vunpack.c.l.b16 %v228
    %v373 = vunpack.c.l.b16 %v229
    %v374 = vunpack.c.l.b16 %v230
    %v375 = vunpack.c.l.b16 %v231
    %v376 = vunpack.c.l.b16 %v232
    %v377 = vunpack.c.l.b16 %v233
    %v378 = vunpack.c.l.b16 %v234
    %v379 = vunpack.c.l.b16 %v235
    %v380 = vunpack.c.l.b16 %v236
    %v381 = vpack.c.b16 %v318, %v317
    %v382 = vpack.c.b16 %v320, %v319
    %v383 = vpack.c.b16 %v322, %v321
    %v384 = vpack.c.b16 %v324, %v323
    %v385 = vpack.c.b16 %v326, %v325
    %v386 = vpack.c.b16 %v328, %v327
    %v387 = vpack.c.b16 %v330, %v329
    %v388 = vpack.c.b16 %v332, %v331
    %v389 = vpack.c.b16 %v334, %v333
    %v390 = vpack.c.b16 %v336, %v335
    %v391 = vpack.c.b16 %v338, %v337
    %v392 = vpack.c.b16 %v340, %v339
    %v393 = vpack.c.b16 %v342, %v341
    %v394 = vpack.c.b16 %v344, %v343
    %v395 = vpack.c.b16 %v346, %v345
    %v396 = vpack.c.b16 %v348, %v347
    %v397 = vpack.c.b16 %v350, %v349
    %v398 = vpack.c.b16 %v352, %v351
    %v399 = vpack.c.b16 %v354, %v353
    %v400 = vpack.c.b16 %v356, %v355
    %v401 = vpack.c.b16 %v358, %v357
    %v402 = vpack.c.b16 %v360, %v359
    %v403 = vpack.c.b16 %v362, %v361
    %v404 = vpack.c.b16 %v364, %v363
    %v405 = vpack.c.b16 %v366, %v365
    %v406 = vpack.c.b16 %v368, %v367
    %v407 = vpack.c.b16 %v370, %v369
    %v408 = vpack.c.b16 %v372, %v371
    %v409 = vpack.c.b16 %v374, %v373
    %v410 = vpack.c.b16 %v376, %v375
    %v411 = vpack.c.b16 %v378, %v377
    %v412 = vpack.c.b16 %v380, %v379
    %v461 = vunpack.c.l.b16 %v237
    %v462 = vunpack.c.l.b16 %v238
    %v463 = vunpack.c.l.b16 %v239
    %v464 = vunpack.c.l.b16 %v240
    %v465 = vunpack.c.l.b16 %v241
    %v466 = vunpack.c.l.b16 %v242
    %v467 = vunpack.c.l.b16 %v243
    %v468 = vunpack.c.l.b16 %v244
    %v469 = vunpack.c.l.b16 %v245
    %v470 = vunpack.c.l.b16 %v246
    %v471 = vunpack.c.l.b16 %v247
    %v472 = vunpack.c.l.b16 %v248
    %v473 = vunpack.c.l.b16 %v249
    %v474 = vunpack.c.l.b16 %v250
    %v475 = vunpack.c.l.b16 %v251
    %v476 = vunpack.c.l.b16 %v252
    %v477 = vpack.c.b16 %v462, %v461
    %v478 = vpack.c.b16 %v464, %v463
    %v479 = vpack.c.b16 %v466, %v465
    %v480 = vpack.c.b16 %v468, %v467
    %v481 = vpack.c.b16 %v470, %v469
    %v482 = vpack.c.b16 %v472, %v471
    %v483 = vpack.c.b16 %v474, %v473
    %v484 = vpack.c.b16 %v476, %v475
    %493 = vmatprep.subr.bf16.mxu0 0
    %494 = vmatpush1.bf16.msra.mxu0 %v477
    %495 = vmatprep.subr.bf16.mxu0 0
    %496 = vmatpush1.bf16.msra.mxu0 %v478
    %497 = vmatprep.subr.bf16.mxu0 0
    %498 = vmatpush1.bf16.msra.mxu0 %v479
    %499 = vmatprep.subr.bf16.mxu0 0
    %500 = vmatpush1.bf16.msra.mxu0 %v480
    %501 = vmatprep.subr.bf16.mxu0 0
    %502 = vmatpush1.bf16.msra.mxu0 %v481
    %503 = vmatprep.subr.bf16.mxu0 0
    %504 = vmatpush1.bf16.msra.mxu0 %v482
    %505 = vmatprep.subr.bf16.mxu0 0
    %506 = vmatpush1.bf16.msra.mxu0 %v483
    %507 = vmatprep.subr.bf16.mxu0 0
    %508 = vmatpush1.bf16.msra.mxu0 %v484
    %509 = vmatprep.subr.bf16.mxu0 0
    %510 = vmatpush1.bf16.msra.mxu0 0
    %511 = vmatprep.subr.bf16.mxu0 0
    %512 = vmatpush1.bf16.msra.mxu0 0
    %513 = vmatprep.subr.bf16.mxu0 0
    %514 = vmatpush1.bf16.msra.mxu0 0
    %515 = vmatprep.subr.bf16.mxu0 0
    %516 = vmatpush1.bf16.msra.mxu0 0
    %517 = vmatprep.subr.bf16.mxu0 0
    %518 = vmatpush1.bf16.msra.mxu0 0
    %519 = vmatprep.subr.bf16.mxu0 0
    %520 = vmatpush1.bf16.msra.mxu0 0
    %521 = vmatprep.subr.bf16.mxu0 0
    %522 = vmatpush1.bf16.msra.mxu0 0
    %523 = vmatprep.subr.bf16.mxu0 0
    %524 = vmatpush1.bf16.msra.mxu0 0
    %525 = vmatprep.mubr.bf16.mxu0 0
    %526 = vmatmul.mubr.bf16.gmra.mrb[0].mxu0 %v381
    %v527 = vpop.f32.mrb[0].mxu0
    %v528 = vadd.f32 0.0, %v527
    %v529 = vpop.f32.mrb[0].mxu0
    %v530 = vpop.f32.mrb[0].mxu0
    %v531 = vadd.f32 0.0, %v530
    %v532 = vpop.f32.mrb[0].mxu0
    %533 = vmatprep.mubr.bf16.mxu0 0
    %534 = vmatmul.mubr.bf16.gmra.mrb[0].mxu0 %v382
    %v535 = vpop.f32.mrb[0].mxu0
    %v536 = vadd.f32 0.0, %v535
    %v537 = vpop.f32.mrb[0].mxu0
    %v538 = vpop.f32.mrb[0].mxu0
    %v539 = vadd.f32 0.0, %v538
    %v540 = vpop.f32.mrb[0].mxu0
    %541 = vmatprep.mubr.bf16.mxu0 0
    %542 = vmatmul.mubr.bf16.gmra.mrb[0].mxu0 %v383
    %v543 = vpop.f32.mrb[0].mxu0
    %v544 = vadd.f32 0.0, %v543
    %v545 = vpop.f32.mrb[0].mxu0
    %v546 = vpop.f32.mrb[0].mxu0
    %v547 = vadd.f32 0.0, %v546
    %v548 = vpop.f32.mrb[0].mxu0
    %549 = vmatprep.mubr.bf16.mxu0 0
    %550 = vmatmul.mubr.bf16.gmra.mrb[0].mxu0 %v384
    %v551 = vpop.f32.mrb[0].mxu0
    %v552 = vadd.f32 0.0, %v551
    %v553 = vpop.f32.mrb[0].mxu0
    %v554 = vpop.f32.mrb[0].mxu0
    %v555 = vadd.f32 0.0, %v554
    %v556 = vpop.f32.mrb[0].mxu0
    %557 = vmatprep.mubr.bf16.mxu0 0
    %558 = vmatmul.mubr.bf16.gmra.mrb[0].mxu0 %v385
    %v559 = vpop.f32.mrb[0].mxu0
    %v560 = vadd.f32 0.0, %v559
    %v561 = vpop.f32.mrb[0].mxu0
    %v562 = vpop.f32.mrb[0].mxu0
    %v563 = vadd.f32 0.0, %v562
    %v564 = vpop.f32.mrb[0].mxu0
    %565 = vmatprep.mubr.bf16.mxu0 0
    %566 = vmatmul.mubr.bf16.gmra.mrb[0].mxu0 %v386
    %v567 = vpop.f32.mrb[0].mxu0
    %v568 = vadd.f32 0.0, %v567
    %v569 = vpop.f32.mrb[0].mxu0
    %v570 = vpop.f32.mrb[0].mxu0
    %v571 = vadd.f32 0.0, %v570
    %v572 = vpop.f32.mrb[0].mxu0
    %573 = vmatprep.mubr.bf16.mxu0 0
    %574 = vmatmul.mubr.bf16.gmra.mrb[0].mxu0 %v387
    %v575 = vpop.f32.mrb[0].mxu0
    %v576 = vadd.f32 0.0, %v575
    %v577 = vpop.f32.mrb[0].mxu0
    %v578 = vpop.f32.mrb[0].mxu0
    %v579 = vadd.f32 0.0, %v578
    %v580 = vpop.f32.mrb[0].mxu0
    %581 = vmatprep.mubr.bf16.mxu0 0
    %582 = vmatmul.mubr.bf16.gmra.mrb[0].mxu0 %v388
    %v583 = vpop.f32.mrb[0].mxu0
    %v584 = vadd.f32 0.0, %v583
    %v585 = vpop.f32.mrb[0].mxu0
    %v586 = vpop.f32.mrb[0].mxu0
    %v587 = vadd.f32 0.0, %v586
    %v588 = vpop.f32.mrb[0].mxu0
    %589 = vmatprep.mubr.bf16.mxu0 0
    %590 = vmatmul.mubr.bf16.gmra.mrb[0].mxu0 %v389
    %v591 = vpop.f32.mrb[0].mxu0
    %v592 = vadd.f32 0.0, %v591
    %v593 = vpop.f32.mrb[0].mxu0
    %v594 = vpop.f32.mrb[0].mxu0
    %v595 = vadd.f32 0.0, %v594
    %v596 = vpop.f32.mrb[0].mxu0
    %597 = vmatprep.mubr.bf16.mxu0 0
    %598 = vmatmul.mubr.bf16.gmra.mrb[0].mxu0 %v390
    %v599 = vpop.f32.mrb[0].mxu0
    %v600 = vadd.f32 0.0, %v599
    %v601 = vpop.f32.mrb[0].mxu0
    %v602 = vpop.f32.mrb[0].mxu0
    %v603 = vadd.f32 0.0, %v602
    %v604 = vpop.f32.mrb[0].mxu0
    %605 = vmatprep.mubr.bf16.mxu0 0
    %606 = vmatmul.mubr.bf16.gmra.mrb[0].mxu0 %v391
    %v607 = vpop.f32.mrb[0].mxu0
    %v608 = vadd.f32 0.0, %v607
    %v609 = vpop.f32.mrb[0].mxu0
    %v610 = vpop.f32.mrb[0].mxu0
    %v611 = vadd.f32 0.0, %v610
    %v612 = vpop.f32.mrb[0].mxu0
    %613 = vmatprep.mubr.bf16.mxu0 0
    %614 = vmatmul.mubr.bf16.gmra.mrb[0].mxu0 %v392
    %v615 = vpop.f32.mrb[0].mxu0
    %v616 = vadd.f32 0.0, %v615
    %v617 = vpop.f32.mrb[0].mxu0
    %v618 = vpop.f32.mrb[0].mxu0
    %v619 = vadd.f32 0.0, %v618
    %v620 = vpop.f32.mrb[0].mxu0
    %621 = vmatprep.mubr.bf16.mxu0 0
    %622 = vmatmul.mubr.bf16.gmra.mrb[0].mxu0 %v393
    %v623 = vpop.f32.mrb[0].mxu0
    %v624 = vadd.f32 0.0, %v623
    %v625 = vpop.f32.mrb[0].mxu0
    %v626 = vpop.f32.mrb[0].mxu0
    %v627 = vadd.f32 0.0, %v626
    %v628 = vpop.f32.mrb[0].mxu0
    %629 = vmatprep.mubr.bf16.mxu0 0
    %630 = vmatmul.mubr.bf16.gmra.mrb[0].mxu0 %v394
    %v631 = vpop.f32.mrb[0].mxu0
    %v632 = vadd.f32 0.0, %v631
    %v633 = vpop.f32.mrb[0].mxu0
    %v634 = vpop.f32.mrb[0].mxu0
    %v635 = vadd.f32 0.0, %v634
    %v636 = vpop.f32.mrb[0].mxu0
    %637 = vmatprep.mubr.bf16.mxu0 0
    %638 = vmatmul.mubr.bf16.gmra.mrb[0].mxu0 %v395
    %v639 = vpop.f32.mrb[0].mxu0
    %v640 = vadd.f32 0.0, %v639
    %v641 = vpop.f32.mrb[0].mxu0
    %v642 = vpop.f32.mrb[0].mxu0
    %v643 = vadd.f32 0.0, %v642
    %v644 = vpop.f32.mrb[0].mxu0
    %645 = vmatprep.mubr.bf16.mxu0 0
    %646 = vmatmul.mubr.bf16.gmra.mrb[0].mxu0 %v396
    %v647 = vpop.f32.mrb[0].mxu0
    %v648 = vadd.f32 0.0, %v647
    %v649 = vpop.f32.mrb[0].mxu0
    %v650 = vpop.f32.mrb[0].mxu0
    %v651 = vadd.f32 0.0, %v650
    %v652 = vpop.f32.mrb[0].mxu0
    %653 = vmatprep.mubr.bf16.mxu0 0
    %654 = vmatmul.mubr.bf16.gmra.mrb[0].mxu0 %v397
    %v655 = vpop.f32.mrb[0].mxu0
    %v656 = vadd.f32 0.0, %v655
    %v657 = vpop.f32.mrb[0].mxu0
    %v658 = vpop.f32.mrb[0].mxu0
    %v659 = vadd.f32 0.0, %v658
    %v660 = vpop.f32.mrb[0].mxu0
    %661 = vmatprep.mubr.bf16.mxu0 0
    %662 = vmatmul.mubr.bf16.gmra.mrb[0].mxu0 %v398
    %v663 = vpop.f32.mrb[0].mxu0
    %v664 = vadd.f32 0.0, %v663
    %v665 = vpop.f32.mrb[0].mxu0
    %v666 = vpop.f32.mrb[0].mxu0
    %v667 = vadd.f32 0.0, %v666
    %v668 = vpop.f32.mrb[0].mxu0
    %669 = vmatprep.mubr.bf16.mxu0 0
    %670 = vmatmul.mubr.bf16.gmra.mrb[0].mxu0 %v399
    %v671 = vpop.f32.mrb[0].mxu0
    %v672 = vadd.f32 0.0, %v671
    %v673 = vpop.f32.mrb[0].mxu0
    %v674 = vpop.f32.mrb[0].mxu0
    %v675 = vadd.f32 0.0, %v674
    %v676 = vpop.f32.mrb[0].mxu0
    %677 = vmatprep.mubr.bf16.mxu0 0
    %678 = vmatmul.mubr.bf16.gmra.mrb[0].mxu0 %v400
    %v679 = vpop.f32.mrb[0].mxu0
    %v680 = vadd.f32 0.0, %v679
    %v681 = vpop.f32.mrb[0].mxu0
    %v682 = vpop.f32.mrb[0].mxu0
    %v683 = vadd.f32 0.0, %v682
    %v684 = vpop.f32.mrb[0].mxu0
    %685 = vmatprep.mubr.bf16.mxu0 0
    %686 = vmatmul.mubr.bf16.gmra.mrb[0].mxu0 %v401
    %v687 = vpop.f32.mrb[0].mxu0
    %v688 = vadd.f32 0.0, %v687
    %v689 = vpop.f32.mrb[0].mxu0
    %v690 = vpop.f32.mrb[0].mxu0
    %v691 = vadd.f32 0.0, %v690
    %v692 = vpop.f32.mrb[0].mxu0
    %693 = vmatprep.mubr.bf16.mxu0 0
    %694 = vmatmul.mubr.bf16.gmra.mrb[0].mxu0 %v402
    %v695 = vpop.f32.mrb[0].mxu0
    %v696 = vadd.f32 0.0, %v695
    %v697 = vpop.f32.mrb[0].mxu0
    %v698 = vpop.f32.mrb[0].mxu0
    %v699 = vadd.f32 0.0, %v698
    %v700 = vpop.f32.mrb[0].mxu0
    %701 = vmatprep.mubr.bf16.mxu0 0
    %702 = vmatmul.mubr.bf16.gmra.mrb[0].mxu0 %v403
    %v703 = vpop.f32.mrb[0].mxu0
    %v704 = vadd.f32 0.0, %v703
    %v705 = vpop.f32.mrb[0].mxu0
    %v706 = vpop.f32.mrb[0].mxu0
    %v707 = vadd.f32 0.0, %v706
    %v708 = vpop.f32.mrb[0].mxu0
    %709 = vmatprep.mubr.bf16.mxu0 0
    %710 = vmatmul.mubr.bf16.gmra.mrb[0].mxu0 %v404
    %v711 = vpop.f32.mrb[0].mxu0
    %v712 = vadd.f32 0.0, %v711
    %v713 = vpop.f32.mrb[0].mxu0
    %v714 = vpop.f32.mrb[0].mxu0
    %v715 = vadd.f32 0.0, %v714
    %v716 = vpop.f32.mrb[0].mxu0
    %717 = vmatprep.mubr.bf16.mxu0 0
    %718 = vmatmul.mubr.bf16.gmra.mrb[0].mxu0 %v405
    %v719 = vpop.f32.mrb[0].mxu0
    %v720 = vadd.f32 0.0, %v719
    %v721 = vpop.f32.mrb[0].mxu0
    %v722 = vpop.f32.mrb[0].mxu0
    %v723 = vadd.f32 0.0, %v722
    %v724 = vpop.f32.mrb[0].mxu0
    %725 = vmatprep.mubr.bf16.mxu0 0
    %726 = vmatmul.mubr.bf16.gmra.mrb[0].mxu0 %v406
    %v727 = vpop.f32.mrb[0].mxu0
    %v728 = vadd.f32 0.0, %v727
    %v729 = vpop.f32.mrb[0].mxu0
    %v730 = vpop.f32.mrb[0].mxu0
    %v731 = vadd.f32 0.0, %v730
    %v732 = vpop.f32.mrb[0].mxu0
    %733 = vmatprep.mubr.bf16.mxu0 0
    %734 = vmatmul.mubr.bf16.gmra.mrb[0].mxu0 %v407
    %v735 = vpop.f32.mrb[0].mxu0
    %v736 = vadd.f32 0.0, %v735
    %v737 = vpop.f32.mrb[0].mxu0
    %v738 = vpop.f32.mrb[0].mxu0
    %v739 = vadd.f32 0.0, %v738
    %v740 = vpop.f32.mrb[0].mxu0
    %741 = vmatprep.mubr.bf16.mxu0 0
    %742 = vmatmul.mubr.bf16.gmra.mrb[0].mxu0 %v408
    %v743 = vpop.f32.mrb[0].mxu0
    %v744 = vadd.f32 0.0, %v743
    %v745 = vpop.f32.mrb[0].mxu0
    %v746 = vpop.f32.mrb[0].mxu0
    %v747 = vadd.f32 0.0, %v746
    %v748 = vpop.f32.mrb[0].mxu0
    %749 = vmatprep.mubr.bf16.mxu0 0
    %750 = vmatmul.mubr.bf16.gmra.mrb[0].mxu0 %v409
    %v751 = vpop.f32.mrb[0].mxu0
    %v752 = vadd.f32 0.0, %v751
    %v753 = vpop.f32.mrb[0].mxu0
    %v754 = vpop.f32.mrb[0].mxu0
    %v755 = vadd.f32 0.0, %v754
    %v756 = vpop.f32.mrb[0].mxu0
    %757 = vmatprep.mubr.bf16.mxu0 0
    %758 = vmatmul.mubr.bf16.gmra.mrb[0].mxu0 %v410
    %v759 = vpop.f32.mrb[0].mxu0
    %v760 = vadd.f32 0.0, %v759
    %v761 = vpop.f32.mrb[0].mxu0
    %v762 = vpop.f32.mrb[0].mxu0
    %v763 = vadd.f32 0.0, %v762
    %v764 = vpop.f32.mrb[0].mxu0
    %765 = vmatprep.mubr.bf16.mxu0 0
    %766 = vmatmul.mubr.bf16.gmra.mrb[0].mxu0 %v411
    %v767 = vpop.f32.mrb[0].mxu0
    %v768 = vadd.f32 0.0, %v767
    %v769 = vpop.f32.mrb[0].mxu0
    %v770 = vpop.f32.mrb[0].mxu0
    %v771 = vadd.f32 0.0, %v770
    %v772 = vpop.f32.mrb[0].mxu0
    %773 = vmatprep.mubr.bf16.mxu0 0
    %774 = vmatmul.mubr.bf16.gmra.mrb[0].mxu0 %v412
    %v775 = vpop.f32.mrb[0].mxu0
    %v776 = vadd.f32 0.0, %v775
    %v777 = vpop.f32.mrb[0].mxu0
    %v778 = vpop.f32.mrb[0].mxu0
    %v779 = vadd.f32 0.0, %v778
    %v780 = vpop.f32.mrb[0].mxu0
    %781 = vdwg.mxu0
    %v782 = vadd.f32 %v109, %v528
    %v783 = vadd.f32 %v110, %v531
    %v784 = vadd.f32 %v111, %v536
    %v785 = vadd.f32 %v112, %v539
    %v786 = vadd.f32 %v113, %v544
    %v787 = vadd.f32 %v114, %v547
    %v788 = vadd.f32 %v115, %v552
    %v789 = vadd.f32 %v116, %v555
    %v790 = vadd.f32 %v117, %v560
    %v791 = vadd.f32 %v118, %v563
    %v792 = vadd.f32 %v119, %v568
    %v793 = vadd.f32 %v120, %v571
    %v794 = vadd.f32 %v121, %v576
    %v795 = vadd.f32 %v122, %v579
    %v796 = vadd.f32 %v123, %v584
    %v797 = vadd.f32 %v124, %v587
    %v798 = vadd.f32 %v125, %v592
    %v799 = vadd.f32 %v126, %v595
    %v800 = vadd.f32 %v127, %v600
    %v801 = vadd.f32 %v128, %v603
    %v802 = vadd.f32 %v129, %v608
    %v803 = vadd.f32 %v130, %v611
    %v804 = vadd.f32 %v131, %v616
    %v805 = vadd.f32 %v132, %v619
    %v806 = vadd.f32 %v133, %v624
    %v807 = vadd.f32 %v134, %v627
    %v808 = vadd.f32 %v135, %v632
    %v809 = vadd.f32 %v136, %v635
    %v810 = vadd.f32 %v137, %v640
    %v811 = vadd.f32 %v138, %v643
    %v812 = vadd.f32 %v139, %v648
    %v813 = vadd.f32 %v140, %v651
    %v814 = vadd.f32 %v141, %v656
    %v815 = vadd.f32 %v142, %v659
    %v816 = vadd.f32 %v143, %v664
    %v817 = vadd.f32 %v144, %v667
    %v818 = vadd.f32 %v145, %v672
    %v819 = vadd.f32 %v146, %v675
    %v820 = vadd.f32 %v147, %v680
    %v821 = vadd.f32 %v148, %v683
    %v822 = vadd.f32 %v149, %v688
    %v823 = vadd.f32 %v150, %v691
    %v824 = vadd.f32 %v151, %v696
    %v825 = vadd.f32 %v152, %v699
    %v826 = vadd.f32 %v153, %v704
    %v827 = vadd.f32 %v154, %v707
    %v828 = vadd.f32 %v155, %v712
    %v829 = vadd.f32 %v156, %v715
    %v830 = vadd.f32 %v157, %v720
    %v831 = vadd.f32 %v158, %v723
    %v832 = vadd.f32 %v159, %v728
    %v833 = vadd.f32 %v160, %v731
    %v834 = vadd.f32 %v161, %v736
    %v835 = vadd.f32 %v162, %v739
    %v836 = vadd.f32 %v163, %v744
    %v837 = vadd.f32 %v164, %v747
    %v838 = vadd.f32 %v165, %v752
    %v839 = vadd.f32 %v166, %v755
    %v840 = vadd.f32 %v167, %v760
    %v841 = vadd.f32 %v168, %v763
    %v842 = vadd.f32 %v169, %v768
    %v843 = vadd.f32 %v170, %v771
    %v844 = vadd.f32 %v171, %v776
    %v845 = vadd.f32 %v172, %v779
    %846 = vst [vmem:[#allocation2] sm:$0xff] %v782
    %847 = vst [vmem:[#allocation2 + $0x8] sm:$0xff] %v783
    %848 = vst [vmem:[#allocation2 + $0x10] sm:$0xff] %v784
    %849 = vst [vmem:[#allocation2 + $0x18] sm:$0xff] %v785
    %850 = vst [vmem:[#allocation2 + $0x20] sm:$0xff] %v786
    %851 = vst [vmem:[#allocation2 + $0x28] sm:$0xff] %v787
    %852 = vst [vmem:[#allocation2 + $0x30] sm:$0xff] %v788
    %853 = vst [vmem:[#allocation2 + $0x38] sm:$0xff] %v789
    %854 = vst [vmem:[#allocation2 + $0x40] sm:$0xff] %v790
    %855 = vst [vmem:[#allocation2 + $0x48] sm:$0xff] %v791
    %856 = vst [vmem:[#allocation2 + $0x50] sm:$0xff] %v792
    %857 = vst [vmem:[#allocation2 + $0x58] sm:$0xff] %v793
    %858 = vst [vmem:[#allocation2 + $0x60] sm:$0xff] %v794
    %859 = vst [vmem:[#allocation2 + $0x68] sm:$0xff] %v795
    %860 = vst [vmem:[#allocation2 + $0x70] sm:$0xff] %v796
    %861 = vst [vmem:[#allocation2 + $0x78] sm:$0xff] %v797
    %862 = vst [vmem:[#allocation2 + $0x80] sm:$0xff] %v798
    %863 = vst [vmem:[#allocation2 + $0x88] sm:$0xff] %v799
    %864 = vst [vmem:[#allocation2 + $0x90] sm:$0xff] %v800
    %865 = vst [vmem:[#allocation2 + $0x98] sm:$0xff] %v801
    %866 = vst [vmem:[#allocation2 + $0xa0] sm:$0xff] %v802
    %867 = vst [vmem:[#allocation2 + $0xa8] sm:$0xff] %v803
    %868 = vst [vmem:[#allocation2 + $0xb0] sm:$0xff] %v804
    %869 = vst [vmem:[#allocation2 + $0xb8] sm:$0xff] %v805
    %870 = vst [vmem:[#allocation2 + $0xc0] sm:$0xff] %v806
    %871 = vst [vmem:[#allocation2 + $0xc8] sm:$0xff] %v807
    %872 = vst [vmem:[#allocation2 + $0xd0] sm:$0xff] %v808
    %873 = vst [vmem:[#allocation2 + $0xd8] sm:$0xff] %v809
    %874 = vst [vmem:[#allocation2 + $0xe0] sm:$0xff] %v810
    %875 = vst [vmem:[#allocation2 + $0xe8] sm:$0xff] %v811
    %876 = vst [vmem:[#allocation2 + $0xf0] sm:$0xff] %v812
    %877 = vst [vmem:[#allocation2 + $0xf8] sm:$0xff] %v813
    %878 = vst [vmem:[#allocation2 + $0x100] sm:$0xff] %v814
    %879 = vst [vmem:[#allocation2 + $0x108] sm:$0xff] %v815
    %880 = vst [vmem:[#allocation2 + $0x110] sm:$0xff] %v816
    %881 = vst [vmem:[#allocation2 + $0x118] sm:$0xff] %v817
    %882 = vst [vmem:[#allocation2 + $0x120] sm:$0xff] %v818
    %883 = vst [vmem:[#allocation2 + $0x128] sm:$0xff] %v819
    %884 = vst [vmem:[#allocation2 + $0x130] sm:$0xff] %v820
    %885 = vst [vmem:[#allocation2 + $0x138] sm:$0xff] %v821
    %886 = vst [vmem:[#allocation2 + $0x140] sm:$0xff] %v822
    %887 = vst [vmem:[#allocation2 + $0x148] sm:$0xff] %v823
    %888 = vst [vmem:[#allocation2 + $0x150] sm:$0xff] %v824
    %889 = vst [vmem:[#allocation2 + $0x158] sm:$0xff] %v825
    %890 = vst [vmem:[#allocation2 + $0x160] sm:$0xff] %v826
    %891 = vst [vmem:[#allocation2 + $0x168] sm:$0xff] %v827
    %892 = vst [vmem:[#allocation2 + $0x170] sm:$0xff] %v828
    %893 = vst [vmem:[#allocation2 + $0x178] sm:$0xff] %v829
    %894 = vst [vmem:[#allocation2 + $0x180] sm:$0xff] %v830
    %895 = vst [vmem:[#allocation2 + $0x188] sm:$0xff] %v831
    %896 = vst [vmem:[#allocation2 + $0x190] sm:$0xff] %v832
    %897 = vst [vmem:[#allocation2 + $0x198] sm:$0xff] %v833
    %898 = vst [vmem:[#allocation2 + $0x1a0] sm:$0xff] %v834
    %899 = vst [vmem:[#allocation2 + $0x1a8] sm:$0xff] %v835
    %900 = vst [vmem:[#allocation2 + $0x1b0] sm:$0xff] %v836
    %901 = vst [vmem:[#allocation2 + $0x1b8] sm:$0xff] %v837
    %902 = vst [vmem:[#allocation2 + $0x1c0] sm:$0xff] %v838
    %903 = vst [vmem:[#allocation2 + $0x1c8] sm:$0xff] %v839
    %904 = vst [vmem:[#allocation2 + $0x1d0] sm:$0xff] %v840
    %905 = vst [vmem:[#allocation2 + $0x1d8] sm:$0xff] %v841
    %906 = vst [vmem:[#allocation2 + $0x1e0] sm:$0xff] %v842
    %907 = vst [vmem:[#allocation2 + $0x1e8] sm:$0xff] %v843
    %908 = vst [vmem:[#allocation2 + $0x1f0] sm:$0xff] %v844
    %909 = vst [vmem:[#allocation2 + $0x1f8] sm:$0xff] %v845
    // Predicated region
    $region22: #{tpu_custom_call.1} parent=1 // pred_check
      %p910 = pneg %p41
    $region23: #{tpu_custom_call.1} parent=1 // pred_check_branch
      %912 = sbr.rel (%p910) target = $region25
    $region24: #{tpu_custom_call.1} parent=1 // pred_region
      %v913 = vld [vmem:[#allocation2] sm:$0xff]
      %v914 = vld [vmem:[#allocation2 + $0x8] sm:$0xff]
      %v915 = vld [vmem:[#allocation2 + $0x10] sm:$0xff]
      %v916 = vld [vmem:[#allocation2 + $0x18] sm:$0xff]
      %v917 = vld [vmem:[#allocation2 + $0x20] sm:$0xff]
      %v918 = vld [vmem:[#allocation2 + $0x28] sm:$0xff]
      %v919 = vld [vmem:[#allocation2 + $0x30] sm:$0xff]
      %v920 = vld [vmem:[#allocation2 + $0x38] sm:$0xff]
      %v921 = vld [vmem:[#allocation2 + $0x40] sm:$0xff]
      %v922 = vld [vmem:[#allocation2 + $0x48] sm:$0xff]
      %v923 = vld [vmem:[#allocation2 + $0x50] sm:$0xff]
      %v924 = vld [vmem:[#allocation2 + $0x58] sm:$0xff]
      %v925 = vld [vmem:[#allocation2 + $0x60] sm:$0xff]
      %v926 = vld [vmem:[#allocation2 + $0x68] sm:$0xff]
      %v927 = vld [vmem:[#allocation2 + $0x70] sm:$0xff]
      %v928 = vld [vmem:[#allocation2 + $0x78] sm:$0xff]
      %v929 = vld [vmem:[#allocation2 + $0x80] sm:$0xff]
      %v930 = vld [vmem:[#allocation2 + $0x88] sm:$0xff]
      %v931 = vld [vmem:[#allocation2 + $0x90] sm:$0xff]
      %v932 = vld [vmem:[#allocation2 + $0x98] sm:$0xff]
      %v933 = vld [vmem:[#allocation2 + $0xa0] sm:$0xff]
      %v934 = vld [vmem:[#allocation2 + $0xa8] sm:$0xff]
      %v935 = vld [vmem:[#allocation2 + $0xb0] sm:$0xff]
      %v936 = vld [vmem:[#allocation2 + $0xb8] sm:$0xff]
      %v937 = vld [vmem:[#allocation2 + $0xc0] sm:$0xff]
      %v938 = vld [vmem:[#allocation2 + $0xc8] sm:$0xff]
      %v939 = vld [vmem:[#allocation2 + $0xd0] sm:$0xff]
      %v940 = vld [vmem:[#allocation2 + $0xd8] sm:$0xff]
      %v941 = vld [vmem:[#allocation2 + $0xe0] sm:$0xff]
      %v942 = vld [vmem:[#allocation2 + $0xe8] sm:$0xff]
      %v943 = vld [vmem:[#allocation2 + $0xf0] sm:$0xff]
      %v944 = vld [vmem:[#allocation2 + $0xf8] sm:$0xff]
      %v945 = vld [vmem:[#allocation2 + $0x100] sm:$0xff]
      %v946 = vld [vmem:[#allocation2 + $0x108] sm:$0xff]
      %v947 = vld [vmem:[#allocation2 + $0x110] sm:$0xff]
      %v948 = vld [vmem:[#allocation2 + $0x118] sm:$0xff]
      %v949 = vld [vmem:[#allocation2 + $0x120] sm:$0xff]
      %v950 = vld [vmem:[#allocation2 + $0x128] sm:$0xff]
      %v951 = vld [vmem:[#allocation2 + $0x130] sm:$0xff]
      %v952 = vld [vmem:[#allocation2 + $0x138] sm:$0xff]
      %v953 = vld [vmem:[#allocation2 + $0x140] sm:$0xff]
      %v954 = vld [vmem:[#allocation2 + $0x148] sm:$0xff]
      %v955 = vld [vmem:[#allocation2 + $0x150] sm:$0xff]
      %v956 = vld [vmem:[#allocation2 + $0x158] sm:$0xff]
      %v957 = vld [vmem:[#allocation2 + $0x160] sm:$0xff]
      %v958 = vld [vmem:[#allocation2 + $0x168] sm:$0xff]
      %v959 = vld [vmem:[#allocation2 + $0x170] sm:$0xff]
      %v960 = vld [vmem:[#allocation2 + $0x178] sm:$0xff]
      %v961 = vld [vmem:[#allocation2 + $0x180] sm:$0xff]
      %v962 = vld [vmem:[#allocation2 + $0x188] sm:$0xff]
      %v963 = vld [vmem:[#allocation2 + $0x190] sm:$0xff]
      %v964 = vld [vmem:[#allocation2 + $0x198] sm:$0xff]
      %v965 = vld [vmem:[#allocation2 + $0x1a0] sm:$0xff]
      %v966 = vld [vmem:[#allocation2 + $0x1a8] sm:$0xff]
      %v967 = vld [vmem:[#allocation2 + $0x1b0] sm:$0xff]
      %v968 = vld [vmem:[#allocation2 + $0x1b8] sm:$0xff]
      %v969 = vld [vmem:[#allocation2 + $0x1c0] sm:$0xff]
      %v970 = vld [vmem:[#allocation2 + $0x1c8] sm:$0xff]
      %v971 = vld [vmem:[#allocation2 + $0x1d0] sm:$0xff]
      %v972 = vld [vmem:[#allocation2 + $0x1d8] sm:$0xff]
      %v973 = vld [vmem:[#allocation2 + $0x1e0] sm:$0xff]
      %v974 = vld [vmem:[#allocation2 + $0x1e8] sm:$0xff]
      %v975 = vld [vmem:[#allocation2 + $0x1f0] sm:$0xff]
      %v976 = vld [vmem:[#allocation2 + $0x1f8] sm:$0xff]
      %vm977 = vcmp.gt.f32.partialorder %v913, 0.0
      %vm978 = vcmp.gt.f32.partialorder %v914, 0.0
      %vm979 = vcmp.gt.f32.partialorder %v915, 0.0
      %vm980 = vcmp.gt.f32.partialorder %v916, 0.0
      %vm981 = vcmp.gt.f32.partialorder %v917, 0.0
      %vm982 = vcmp.gt.f32.partialorder %v918, 0.0
      %vm983 = vcmp.gt.f32.partialorder %v919, 0.0
      %vm984 = vcmp.gt.f32.partialorder %v920, 0.0
      %vm985 = vcmp.gt.f32.partialorder %v921, 0.0
      %vm986 = vcmp.gt.f32.partialorder %v922, 0.0
      %vm987 = vcmp.gt.f32.partialorder %v923, 0.0
      %vm988 = vcmp.gt.f32.partialorder %v924, 0.0
      %vm989 = vcmp.gt.f32.partialorder %v925, 0.0
      %vm990 = vcmp.gt.f32.partialorder %v926, 0.0
      %vm991 = vcmp.gt.f32.partialorder %v927, 0.0
      %vm992 = vcmp.gt.f32.partialorder %v928, 0.0
      %vm993 = vcmp.gt.f32.partialorder %v929, 0.0
      %vm994 = vcmp.gt.f32.partialorder %v930, 0.0
      %vm995 = vcmp.gt.f32.partialorder %v931, 0.0
      %vm996 = vcmp.gt.f32.partialorder %v932, 0.0
      %vm997 = vcmp.gt.f32.partialorder %v933, 0.0
      %vm998 = vcmp.gt.f32.partialorder %v934, 0.0
      %vm999 = vcmp.gt.f32.partialorder %v935, 0.0
      %vm1000 = vcmp.gt.f32.partialorder %v936, 0.0
      %vm1001 = vcmp.gt.f32.partialorder %v937, 0.0
      %vm1002 = vcmp.gt.f32.partialorder %v938, 0.0
      %vm1003 = vcmp.gt.f32.partialorder %v939, 0.0
      %vm1004 = vcmp.gt.f32.partialorder %v940, 0.0
      %vm1005 = vcmp.gt.f32.partialorder %v941, 0.0
      %vm1006 = vcmp.gt.f32.partialorder %v942, 0.0
      %vm1007 = vcmp.gt.f32.partialorder %v943, 0.0
      %vm1008 = vcmp.gt.f32.partialorder %v944, 0.0
      %vm1009 = vcmp.gt.f32.partialorder %v945, 0.0
      %vm1010 = vcmp.gt.f32.partialorder %v946, 0.0
      %vm1011 = vcmp.gt.f32.partialorder %v947, 0.0
      %vm1012 = vcmp.gt.f32.partialorder %v948, 0.0
      %vm1013 = vcmp.gt.f32.partialorder %v949, 0.0
      %vm1014 = vcmp.gt.f32.partialorder %v950, 0.0
      %vm1015 = vcmp.gt.f32.partialorder %v951, 0.0
      %vm1016 = vcmp.gt.f32.partialorder %v952, 0.0
      %vm1017 = vcmp.gt.f32.partialorder %v953, 0.0
      %vm1018 = vcmp.gt.f32.partialorder %v954, 0.0
      %vm1019 = vcmp.gt.f32.partialorder %v955, 0.0
      %vm1020 = vcmp.gt.f32.partialorder %v956, 0.0
      %vm1021 = vcmp.gt.f32.partialorder %v957, 0.0
      %vm1022 = vcmp.gt.f32.partialorder %v958, 0.0
      %vm1023 = vcmp.gt.f32.partialorder %v959, 0.0
      %vm1024 = vcmp.gt.f32.partialorder %v960, 0.0
      %vm1025 = vcmp.gt.f32.partialorder %v961, 0.0
      %vm1026 = vcmp.gt.f32.partialorder %v962, 0.0
      %vm1027 = vcmp.gt.f32.partialorder %v963, 0.0
      %vm1028 = vcmp.gt.f32.partialorder %v964, 0.0
      %vm1029 = vcmp.gt.f32.partialorder %v965, 0.0
      %vm1030 = vcmp.gt.f32.partialorder %v966, 0.0
      %vm1031 = vcmp.gt.f32.partialorder %v967, 0.0
      %vm1032 = vcmp.gt.f32.partialorder %v968, 0.0
      %vm1033 = vcmp.gt.f32.partialorder %v969, 0.0
      %vm1034 = vcmp.gt.f32.partialorder %v970, 0.0
      %vm1035 = vcmp.gt.f32.partialorder %v971, 0.0
      %vm1036 = vcmp.gt.f32.partialorder %v972, 0.0
      %vm1037 = vcmp.gt.f32.partialorder %v973, 0.0
      %vm1038 = vcmp.gt.f32.partialorder %v974, 0.0
      %vm1039 = vcmp.gt.f32.partialorder %v975, 0.0
      %vm1040 = vcmp.gt.f32.partialorder %v976, 0.0
      %v1041 = vmul.f32 %v913, 0.2
      %v1042 = vmul.f32 %v914, 0.2
      %v1043 = vmul.f32 %v915, 0.2
      %v1044 = vmul.f32 %v916, 0.2
      %v1045 = vmul.f32 %v917, 0.2
      %v1046 = vmul.f32 %v918, 0.2
      %v1047 = vmul.f32 %v919, 0.2
      %v1048 = vmul.f32 %v920, 0.2
      %v1049 = vmul.f32 %v921, 0.2
      %v1050 = vmul.f32 %v922, 0.2
      %v1051 = vmul.f32 %v923, 0.2
      %v1052 = vmul.f32 %v924, 0.2
      %v1053 = vmul.f32 %v925, 0.2
      %v1054 = vmul.f32 %v926, 0.2
      %v1055 = vmul.f32 %v927, 0.2
      %v1056 = vmul.f32 %v928, 0.2
      %v1057 = vmul.f32 %v929, 0.2
      %v1058 = vmul.f32 %v930, 0.2
      %v1059 = vmul.f32 %v931, 0.2
      %v1060 = vmul.f32 %v932, 0.2
      %v1061 = vmul.f32 %v933, 0.2
      %v1062 = vmul.f32 %v934, 0.2
      %v1063 = vmul.f32 %v935, 0.2
      %v1064 = vmul.f32 %v936, 0.2
      %v1065 = vmul.f32 %v937, 0.2
      %v1066 = vmul.f32 %v938, 0.2
      %v1067 = vmul.f32 %v939, 0.2
      %v1068 = vmul.f32 %v940, 0.2
      %v1069 = vmul.f32 %v941, 0.2
      %v1070 = vmul.f32 %v942, 0.2
      %v1071 = vmul.f32 %v943, 0.2
      %v1072 = vmul.f32 %v944, 0.2
      %v1073 = vmul.f32 %v945, 0.2
      %v1074 = vmul.f32 %v946, 0.2
      %v1075 = vmul.f32 %v947, 0.2
      %v1076 = vmul.f32 %v948, 0.2
      %v1077 = vmul.f32 %v949, 0.2
      %v1078 = vmul.f32 %v950, 0.2
      %v1079 = vmul.f32 %v951, 0.2
      %v1080 = vmul.f32 %v952, 0.2
      %v1081 = vmul.f32 %v953, 0.2
      %v1082 = vmul.f32 %v954, 0.2
      %v1083 = vmul.f32 %v955, 0.2
      %v1084 = vmul.f32 %v956, 0.2
      %v1085 = vmul.f32 %v957, 0.2
      %v1086 = vmul.f32 %v958, 0.2
      %v1087 = vmul.f32 %v959, 0.2
      %v1088 = vmul.f32 %v960, 0.2
      %v1089 = vmul.f32 %v961, 0.2
      %v1090 = vmul.f32 %v962, 0.2
      %v1091 = vmul.f32 %v963, 0.2
      %v1092 = vmul.f32 %v964, 0.2
      %v1093 = vmul.f32 %v965, 0.2
      %v1094 = vmul.f32 %v966, 0.2
      %v1095 = vmul.f32 %v967, 0.2
      %v1096 = vmul.f32 %v968, 0.2
      %v1097 = vmul.f32 %v969, 0.2
      %v1098 = vmul.f32 %v970, 0.2
      %v1099 = vmul.f32 %v971, 0.2
      %v1100 = vmul.f32 %v972, 0.2
      %v1101 = vmul.f32 %v973, 0.2
      %v1102 = vmul.f32 %v974, 0.2
      %v1103 = vmul.f32 %v975, 0.2
      %v1104 = vmul.f32 %v976, 0.2
      %v1105 = vsel %vm977, %v913, %v1041
      %v1106 = vsel %vm978, %v914, %v1042
      %v1107 = vsel %vm979, %v915, %v1043
      %v1108 = vsel %vm980, %v916, %v1044
      %v1109 = vsel %vm981, %v917, %v1045
      %v1110 = vsel %vm982, %v918, %v1046
      %v1111 = vsel %vm983, %v919, %v1047
      %v1112 = vsel %vm984, %v920, %v1048
      %v1113 = vsel %vm985, %v921, %v1049
      %v1114 = vsel %vm986, %v922, %v1050
      %v1115 = vsel %vm987, %v923, %v1051
      %v1116 = vsel %vm988, %v924, %v1052
      %v1117 = vsel %vm989, %v925, %v1053
      %v1118 = vsel %vm990, %v926, %v1054
      %v1119 = vsel %vm991, %v927, %v1055
      %v1120 = vsel %vm992, %v928, %v1056
      %v1121 = vsel %vm993, %v929, %v1057
      %v1122 = vsel %vm994, %v930, %v1058
      %v1123 = vsel %vm995, %v931, %v1059
      %v1124 = vsel %vm996, %v932, %v1060
      %v1125 = vsel %vm997, %v933, %v1061
      %v1126 = vsel %vm998, %v934, %v1062
      %v1127 = vsel %vm999, %v935, %v1063
      %v1128 = vsel %vm1000, %v936, %v1064
      %v1129 = vsel %vm1001, %v937, %v1065
      %v1130 = vsel %vm1002, %v938, %v1066
      %v1131 = vsel %vm1003, %v939, %v1067
      %v1132 = vsel %vm1004, %v940, %v1068
      %v1133 = vsel %vm1005, %v941, %v1069
      %v1134 = vsel %vm1006, %v942, %v1070
      %v1135 = vsel %vm1007, %v943, %v1071
      %v1136 = vsel %vm1008, %v944, %v1072
      %v1137 = vsel %vm1009, %v945, %v1073
      %v1138 = vsel %vm1010, %v946, %v1074
      %v1139 = vsel %vm1011, %v947, %v1075
      %v1140 = vsel %vm1012, %v948, %v1076
      %v1141 = vsel %vm1013, %v949, %v1077
      %v1142 = vsel %vm1014, %v950, %v1078
      %v1143 = vsel %vm1015, %v951, %v1079
      %v1144 = vsel %vm1016, %v952, %v1080
      %v1145 = vsel %vm1017, %v953, %v1081
      %v1146 = vsel %vm1018, %v954, %v1082
      %v1147 = vsel %vm1019, %v955, %v1083
      %v1148 = vsel %vm1020, %v956, %v1084
      %v1149 = vsel %vm1021, %v957, %v1085
      %v1150 = vsel %vm1022, %v958, %v1086
      %v1151 = vsel %vm1023, %v959, %v1087
      %v1152 = vsel %vm1024, %v960, %v1088
      %v1153 = vsel %vm1025, %v961, %v1089
      %v1154 = vsel %vm1026, %v962, %v1090
      %v1155 = vsel %vm1027, %v963, %v1091
      %v1156 = vsel %vm1028, %v964, %v1092
      %v1157 = vsel %vm1029, %v965, %v1093
      %v1158 = vsel %vm1030, %v966, %v1094
      %v1159 = vsel %vm1031, %v967, %v1095
      %v1160 = vsel %vm1032, %v968, %v1096
      %v1161 = vsel %vm1033, %v969, %v1097
      %v1162 = vsel %vm1034, %v970, %v1098
      %v1163 = vsel %vm1035, %v971, %v1099
      %v1164 = vsel %vm1036, %v972, %v1100
      %v1165 = vsel %vm1037, %v973, %v1101
      %v1166 = vsel %vm1038, %v974, %v1102
      %v1167 = vsel %vm1039, %v975, %v1103
      %v1168 = vsel %vm1040, %v976, %v1104
      %v1169 = vpack.c.bf16 %v1106, %v1105
      %v1170 = vpack.c.bf16 %v1108, %v1107
      %v1171 = vpack.c.bf16 %v1110, %v1109
      %v1172 = vpack.c.bf16 %v1112, %v1111
      %v1173 = vpack.c.bf16 %v1114, %v1113
      %v1174 = vpack.c.bf16 %v1116, %v1115
      %v1175 = vpack.c.bf16 %v1118, %v1117
      %v1176 = vpack.c.bf16 %v1120, %v1119
      %v1177 = vpack.c.bf16 %v1122, %v1121
      %v1178 = vpack.c.bf16 %v1124, %v1123
      %v1179 = vpack.c.bf16 %v1126, %v1125
      %v1180 = vpack.c.bf16 %v1128, %v1127
      %v1181 = vpack.c.bf16 %v1130, %v1129
      %v1182 = vpack.c.bf16 %v1132, %v1131
      %v1183 = vpack.c.bf16 %v1134, %v1133
      %v1184 = vpack.c.bf16 %v1136, %v1135
      %v1185 = vpack.c.bf16 %v1138, %v1137
      %v1186 = vpack.c.bf16 %v1140, %v1139
      %v1187 = vpack.c.bf16 %v1142, %v1141
      %v1188 = vpack.c.bf16 %v1144, %v1143
      %v1189 = vpack.c.bf16 %v1146, %v1145
      %v1190 = vpack.c.bf16 %v1148, %v1147
      %v1191 = vpack.c.bf16 %v1150, %v1149
      %v1192 = vpack.c.bf16 %v1152, %v1151
      %v1193 = vpack.c.bf16 %v1154, %v1153
      %v1194 = vpack.c.bf16 %v1156, %v1155
      %v1195 = vpack.c.bf16 %v1158, %v1157
      %v1196 = vpack.c.bf16 %v1160, %v1159
      %v1197 = vpack.c.bf16 %v1162, %v1161
      %v1198 = vpack.c.bf16 %v1164, %v1163
      %v1199 = vpack.c.bf16 %v1166, %v1165
      %v1200 = vpack.c.bf16 %v1168, %v1167
      %v1233 = vunpack.c.l.b16 %v1169
      %v1234 = vunpack.c.h.b16 %v1169
      %v1235 = vunpack.c.l.b16 %v1170
      %v1236 = vunpack.c.h.b16 %v1170
      %v1237 = vunpack.c.l.b16 %v1171
      %v1238 = vunpack.c.h.b16 %v1171
      %v1239 = vunpack.c.l.b16 %v1172
      %v1240 = vunpack.c.h.b16 %v1172
      %v1241 = vunpack.c.l.b16 %v1173
      %v1242 = vunpack.c.h.b16 %v1173
      %v1243 = vunpack.c.l.b16 %v1174
      %v1244 = vunpack.c.h.b16 %v1174
      %v1245 = vunpack.c.l.b16 %v1175
      %v1246 = vunpack.c.h.b16 %v1175
      %v1247 = vunpack.c.l.b16 %v1176
      %v1248 = vunpack.c.h.b16 %v1176
      %v1249 = vunpack.c.l.b16 %v1177
      %v1250 = vunpack.c.h.b16 %v1177
      %v1251 = vunpack.c.l.b16 %v1178
      %v1252 = vunpack.c.h.b16 %v1178
      %v1253 = vunpack.c.l.b16 %v1179
      %v1254 = vunpack.c.h.b16 %v1179
      %v1255 = vunpack.c.l.b16 %v1180
      %v1256 = vunpack.c.h.b16 %v1180
      %v1257 = vunpack.c.l.b16 %v1181
      %v1258 = vunpack.c.h.b16 %v1181
      %v1259 = vunpack.c.l.b16 %v1182
      %v1260 = vunpack.c.h.b16 %v1182
      %v1261 = vunpack.c.l.b16 %v1183
      %v1262 = vunpack.c.h.b16 %v1183
      %v1263 = vunpack.c.l.b16 %v1184
      %v1264 = vunpack.c.h.b16 %v1184
      %v1265 = vunpack.c.l.b16 %v1185
      %v1266 = vunpack.c.h.b16 %v1185
      %v1267 = vunpack.c.l.b16 %v1186
      %v1268 = vunpack.c.h.b16 %v1186
      %v1269 = vunpack.c.l.b16 %v1187
      %v1270 = vunpack.c.h.b16 %v1187
      %v1271 = vunpack.c.l.b16 %v1188
      %v1272 = vunpack.c.h.b16 %v1188
      %v1273 = vunpack.c.l.b16 %v1189
      %v1274 = vunpack.c.h.b16 %v1189
      %v1275 = vunpack.c.l.b16 %v1190
      %v1276 = vunpack.c.h.b16 %v1190
      %v1277 = vunpack.c.l.b16 %v1191
      %v1278 = vunpack.c.h.b16 %v1191
      %v1279 = vunpack.c.l.b16 %v1192
      %v1280 = vunpack.c.h.b16 %v1192
      %v1281 = vunpack.c.l.b16 %v1193
      %v1282 = vunpack.c.h.b16 %v1193
      %v1283 = vunpack.c.l.b16 %v1194
      %v1284 = vunpack.c.h.b16 %v1194
      %v1285 = vunpack.c.l.b16 %v1195
      %v1286 = vunpack.c.h.b16 %v1195
      %v1287 = vunpack.c.l.b16 %v1196
      %v1288 = vunpack.c.h.b16 %v1196
      %v1289 = vunpack.c.l.b16 %v1197
      %v1290 = vunpack.c.h.b16 %v1197
      %v1291 = vunpack.c.l.b16 %v1198
      %v1292 = vunpack.c.h.b16 %v1198
      %v1293 = vunpack.c.l.b16 %v1199
      %v1294 = vunpack.c.h.b16 %v1199
      %v1295 = vunpack.c.l.b16 %v1200
      %v1296 = vunpack.c.h.b16 %v1200
      %v1297 = vpack.c.b16 %v1233, %v1233
      %v1298 = vpack.c.b16 %v1234, %v1234
      %v1299 = vpack.c.b16 %v1235, %v1235
      %v1300 = vpack.c.b16 %v1236, %v1236
      %v1301 = vpack.c.b16 %v1237, %v1237
      %v1302 = vpack.c.b16 %v1238, %v1238
      %v1303 = vpack.c.b16 %v1239, %v1239
      %v1304 = vpack.c.b16 %v1240, %v1240
      %v1305 = vpack.c.b16 %v1241, %v1241
      %v1306 = vpack.c.b16 %v1242, %v1242
      %v1307 = vpack.c.b16 %v1243, %v1243
      %v1308 = vpack.c.b16 %v1244, %v1244
      %v1309 = vpack.c.b16 %v1245, %v1245
      %v1310 = vpack.c.b16 %v1246, %v1246
      %v1311 = vpack.c.b16 %v1247, %v1247
      %v1312 = vpack.c.b16 %v1248, %v1248
      %v1313 = vpack.c.b16 %v1249, %v1249
      %v1314 = vpack.c.b16 %v1250, %v1250
      %v1315 = vpack.c.b16 %v1251, %v1251
      %v1316 = vpack.c.b16 %v1252, %v1252
      %v1317 = vpack.c.b16 %v1253, %v1253
      %v1318 = vpack.c.b16 %v1254, %v1254
      %v1319 = vpack.c.b16 %v1255, %v1255
      %v1320 = vpack.c.b16 %v1256, %v1256
      %v1321 = vpack.c.b16 %v1257, %v1257
      %v1322 = vpack.c.b16 %v1258, %v1258
      %v1323 = vpack.c.b16 %v1259, %v1259
      %v1324 = vpack.c.b16 %v1260, %v1260
      %v1325 = vpack.c.b16 %v1261, %v1261
      %v1326 = vpack.c.b16 %v1262, %v1262
      %v1327 = vpack.c.b16 %v1263, %v1263
      %v1328 = vpack.c.b16 %v1264, %v1264
      %v1329 = vpack.c.b16 %v1265, %v1265
      %v1330 = vpack.c.b16 %v1266, %v1266
      %v1331 = vpack.c.b16 %v1267, %v1267
      %v1332 = vpack.c.b16 %v1268, %v1268
      %v1333 = vpack.c.b16 %v1269, %v1269
      %v1334 = vpack.c.b16 %v1270, %v1270
      %v1335 = vpack.c.b16 %v1271, %v1271
      %v1336 = vpack.c.b16 %v1272, %v1272
      %v1337 = vpack.c.b16 %v1273, %v1273
      %v1338 = vpack.c.b16 %v1274, %v1274
      %v1339 = vpack.c.b16 %v1275, %v1275
      %v1340 = vpack.c.b16 %v1276, %v1276
      %v1341 = vpack.c.b16 %v1277, %v1277
      %v1342 = vpack.c.b16 %v1278, %v1278
      %v1343 = vpack.c.b16 %v1279, %v1279
      %v1344 = vpack.c.b16 %v1280, %v1280
      %v1345 = vpack.c.b16 %v1281, %v1281
      %v1346 = vpack.c.b16 %v1282, %v1282
      %v1347 = vpack.c.b16 %v1283, %v1283
      %v1348 = vpack.c.b16 %v1284, %v1284
      %v1349 = vpack.c.b16 %v1285, %v1285
      %v1350 = vpack.c.b16 %v1286, %v1286
      %v1351 = vpack.c.b16 %v1287, %v1287
      %v1352 = vpack.c.b16 %v1288, %v1288
      %v1353 = vpack.c.b16 %v1289, %v1289
      %v1354 = vpack.c.b16 %v1290, %v1290
      %v1355 = vpack.c.b16 %v1291, %v1291
      %v1356 = vpack.c.b16 %v1292, %v1292
      %v1357 = vpack.c.b16 %v1293, %v1293
      %v1358 = vpack.c.b16 %v1294, %v1294
      %v1359 = vpack.c.b16 %v1295, %v1295
      %v1360 = vpack.c.b16 %v1296, %v1296
      %1425 = vst [vmem:[#allocation8] sm:$0xf] %v1297
      %1426 = vst [vmem:[#allocation8 + $0x4] sm:$0xf] %v1298
      %1427 = vst [vmem:[#allocation8 + $0x8] sm:$0xf] %v1299
      %1428 = vst [vmem:[#allocation8 + $0xc] sm:$0xf] %v1300
      %1429 = vst [vmem:[#allocation8 + $0x10] sm:$0xf] %v1301
      %1430 = vst [vmem:[#allocation8 + $0x14] sm:$0xf] %v1302
      %1431 = vst [vmem:[#allocation8 + $0x18] sm:$0xf] %v1303
      %1432 = vst [vmem:[#allocation8 + $0x1c] sm:$0xf] %v1304
      %1433 = vst [vmem:[#allocation8 + $0x20] sm:$0xf] %v1305
      %1434 = vst [vmem:[#allocation8 + $0x24] sm:$0xf] %v1306
      %1435 = vst [vmem:[#allocation8 + $0x28] sm:$0xf] %v1307
      %1436 = vst [vmem:[#allocation8 + $0x2c] sm:$0xf] %v1308
      %1437 = vst [vmem:[#allocation8 + $0x30] sm:$0xf] %v1309
      %1438 = vst [vmem:[#allocation8 + $0x34] sm:$0xf] %v1310
      %1439 = vst [vmem:[#allocation8 + $0x38] sm:$0xf] %v1311
      %1440 = vst [vmem:[#allocation8 + $0x3c] sm:$0xf] %v1312
      %1441 = vst [vmem:[#allocation8 + $0x40] sm:$0xf] %v1313
      %1442 = vst [vmem:[#allocation8 + $0x44] sm:$0xf] %v1314
      %1443 = vst [vmem:[#allocation8 + $0x48] sm:$0xf] %v1315
      %1444 = vst [vmem:[#allocation8 + $0x4c] sm:$0xf] %v1316
      %1445 = vst [vmem:[#allocation8 + $0x50] sm:$0xf] %v1317
      %1446 = vst [vmem:[#allocation8 + $0x54] sm:$0xf] %v1318
      %1447 = vst [vmem:[#allocation8 + $0x58] sm:$0xf] %v1319
      %1448 = vst [vmem:[#allocation8 + $0x5c] sm:$0xf] %v1320
      %1449 = vst [vmem:[#allocation8 + $0x60] sm:$0xf] %v1321
      %1450 = vst [vmem:[#allocation8 + $0x64] sm:$0xf] %v1322
      %1451 = vst [vmem:[#allocation8 + $0x68] sm:$0xf] %v1323
      %1452 = vst [vmem:[#allocation8 + $0x6c] sm:$0xf] %v1324
      %1453 = vst [vmem:[#allocation8 + $0x70] sm:$0xf] %v1325
      %1454 = vst [vmem:[#allocation8 + $0x74] sm:$0xf] %v1326
      %1455 = vst [vmem:[#allocation8 + $0x78] sm:$0xf] %v1327
      %1456 = vst [vmem:[#allocation8 + $0x7c] sm:$0xf] %v1328
      %1457 = vst [vmem:[#allocation8 + $0x80] sm:$0xf] %v1329
      %1458 = vst [vmem:[#allocation8 + $0x84] sm:$0xf] %v1330
      %1459 = vst [vmem:[#allocation8 + $0x88] sm:$0xf] %v1331
      %1460 = vst [vmem:[#allocation8 + $0x8c] sm:$0xf] %v1332
      %1461 = vst [vmem:[#allocation8 + $0x90] sm:$0xf] %v1333
      %1462 = vst [vmem:[#allocation8 + $0x94] sm:$0xf] %v1334
      %1463 = vst [vmem:[#allocation8 + $0x98] sm:$0xf] %v1335
      %1464 = vst [vmem:[#allocation8 + $0x9c] sm:$0xf] %v1336
      %1465 = vst [vmem:[#allocation8 + $0xa0] sm:$0xf] %v1337
      %1466 = vst [vmem:[#allocation8 + $0xa4] sm:$0xf] %v1338
      %1467 = vst [vmem:[#allocation8 + $0xa8] sm:$0xf] %v1339
      %1468 = vst [vmem:[#allocation8 + $0xac] sm:$0xf] %v1340
      %1469 = vst [vmem:[#allocation8 + $0xb0] sm:$0xf] %v1341
      %1470 = vst [vmem:[#allocation8 + $0xb4] sm:$0xf] %v1342
      %1471 = vst [vmem:[#allocation8 + $0xb8] sm:$0xf] %v1343
      %1472 = vst [vmem:[#allocation8 + $0xbc] sm:$0xf] %v1344
      %1473 = vst [vmem:[#allocation8 + $0xc0] sm:$0xf] %v1345
      %1474 = vst [vmem:[#allocation8 + $0xc4] sm:$0xf] %v1346
      %1475 = vst [vmem:[#allocation8 + $0xc8] sm:$0xf] %v1347
      %1476 = vst [vmem:[#allocation8 + $0xcc] sm:$0xf] %v1348
      %1477 = vst [vmem:[#allocation8 + $0xd0] sm:$0xf] %v1349
      %1478 = vst [vmem:[#allocation8 + $0xd4] sm:$0xf] %v1350
      %1479 = vst [vmem:[#allocation8 + $0xd8] sm:$0xf] %v1351
      %1480 = vst [vmem:[#allocation8 + $0xdc] sm:$0xf] %v1352
      %1481 = vst [vmem:[#allocation8 + $0xe0] sm:$0xf] %v1353
      %1482 = vst [vmem:[#allocation8 + $0xe4] sm:$0xf] %v1354
      %1483 = vst [vmem:[#allocation8 + $0xe8] sm:$0xf] %v1355
      %1484 = vst [vmem:[#allocation8 + $0xec] sm:$0xf] %v1356
      %1485 = vst [vmem:[#allocation8 + $0xf0] sm:$0xf] %v1357
      %1486 = vst [vmem:[#allocation8 + $0xf4] sm:$0xf] %v1358
      %1487 = vst [vmem:[#allocation8 + $0xf8] sm:$0xf] %v1359
      %1488 = vst [vmem:[#allocation8 + $0xfc] sm:$0xf] %v1360
    $region25: #{tpu_custom_call.1} parent=1 // pred_fallthru
      _
    // Predicated region
    $region26: #{tpu_custom_call.1} parent=1 // pred_check
      _
    $region27: #{tpu_custom_call.1} parent=1 // pred_check_branch
      %1490 = sbr.rel (0) target = $region29
    $region28: #{tpu_custom_call.1} parent=1 // pred_region
      %s1492 = ssub.s32 4096, 4096
      %1493 = vsyncadd [#allocation5], %s1492
      %s1494 = sshll.u32 [#allocation8], 4
      %s1495 = int_to_ptr.vmem [resolvable:$true] %s1494
      %1500 = dma.vmem_to_hbm [thread:$0]  %s1495, 4096, %s2, [#allocation5], 64, 64, 4
    $region29: #{tpu_custom_call.1} parent=1 // pred_fallthru
      _
    // Predicated region
    $region30: #{tpu_custom_call.1} parent=1 // pred_check
      _
    $region31: #{tpu_custom_call.1} parent=1 // pred_check_branch
      %1502 = sbr.rel (0) target = $region33
    $region32: #{tpu_custom_call.1} parent=1 // pred_region
      %1503 = dma.done [#allocation5], 4096
    $region33: #{tpu_custom_call.1} parent=1 // pred_fallthru
      _
    %1504 = vsyncpa [#allocation4], 1
    %1505 = vsyncpa [#allocation7], 1
    %1506 = vsyncpa [#allocation5], 1

</llo_original>
